<compile_context>
chip_gen: v5e
topology: v5e:2x2
jax: 0.10.0
libtpu: 0.0.40
codegen_flags: <defaults>
</compile_context>

<pallas_src>
import functools

import jax
import jax.numpy as jnp
from jax.experimental import pallas as pl
from jax.experimental.pallas import tpu as pltpu


# Original and (hidden-only) lane-padded feature dims along the layer chain.
DIMS = (784, 256, 64, 20, 64, 256, 784)
PADDED = (784, 256, 128, 128, 128, 256, 784)   # input/output left unpadded


def _round_up(x, m):
    return pl.cdiv(x, m) * m


def _choose_tiling(batch, tb_max):
    """Pick (tb, padded_batch, grid_steps).

    - tb is a multiple of 8 (sublane constraint), capped at tb_max.
    - Batch padding waste is bounded to < tb + 8 rows (not round_up(b, tb)).
    - Prefer an even (>=2) step count when it adds no meaningful padding:
      the single "parallel" grid axis is what shards across v7x's 2 TCs.
    """
    tb_max = max(8, (tb_max // 8) * 8)
    pb8 = _round_up(batch, 8)
    steps = pl.cdiv(pb8, tb_max)
    if steps == 1:
        if pb8 >= 16:
            steps = 2          # megacore split, no extra padding added
    elif steps % 2 == 1:
        steps += 1             # even step count for the 2-TC split
    tb = _round_up(pl.cdiv(pb8, steps), 8)
    pb = steps * tb
    return tb, pb, steps


def ae_kernel(x_ref,
              w1_ref, b1_ref, w2_ref, b2_ref, w3_ref, b3_ref,
              w4_ref, b4_ref, w5_ref, b5_ref, w6_ref, b6_ref,
              o_ref):
    """One batch tile: 6 MXU matmuls + activations, all in VMEM."""

    def linear(h_bf16, w_ref, b_ref):
        # bf16 x bf16 -> f32 accumulate on the MXU, f32 bias add on the VPU.
        y = jnp.dot(h_bf16, w_ref[...], preferred_element_type=jnp.float32)
        return y + b_ref[...]

    def linear_relu(h_bf16, w_ref, b_ref):
        # ReLU in f32 (v5e VPU has no bf16); narrow to bf16 only as the next
        # MXU operand.
        return jnp.maximum(linear(h_bf16, w_ref, b_ref), 0.0).astype(jnp.bfloat16)

    h = x_ref[...]                               # [TB, 784] bf16 (cast upstream)
    # Encoder
    h = linear_relu(h, w1_ref, b1_ref)           # [TB, 256]
    h = linear_relu(h, w2_ref, b2_ref)           # [TB, 128]  (64 padded)
    h = linear_relu(h, w3_ref, b3_ref)           # [TB, 128]  (20 padded)
    # Decoder
    h = linear_relu(h, w4_ref, b4_ref)           # [TB, 128]  (64 padded)
    h = linear_relu(h, w5_ref, b5_ref)           # [TB, 256]
    y = linear(h, w6_ref, b6_ref)                # [TB, 784]  f32
    # sigmoid(y) = 1 / (1 + exp(-y)); approx reciprocal runs on the EUP slot.
    t = jnp.exp(-y)
    o_ref[...] = pl.reciprocal(1.0 + t, approx=True).astype(o_ref.dtype)


def init_params(key):
    """Deterministic synthetic parameters (shapes match the PyTorch module)."""
    shapes = list(zip(DIMS[:-1], DIMS[1:]))
    params = []
    for i, (din, dout) in enumerate(shapes):
        kw, kb = jax.random.split(jax.random.fold_in(key, i))
        scale = 1.0 / jnp.sqrt(jnp.float32(din))
        w = jax.random.uniform(kw, (din, dout), jnp.float32, -scale, scale)
        b = jax.random.uniform(kb, (1, dout), jnp.float32, -scale, scale)
        params += [w, b]
    return params


def pack_params(params):
    """Zero-pad hidden dims to lane multiples; weights -> bf16, biases f32."""
    packed = []
    for i in range(6):
        w, b = params[2 * i], params[2 * i + 1]
        din, dout = DIMS[i], DIMS[i + 1]
        pin, pout = PADDED[i], PADDED[i + 1]
        wp = jnp.zeros((pin, pout), jnp.float32).at[:din, :dout].set(w)
        bp = jnp.zeros((1, pout), jnp.float32).at[:, :dout].set(b.reshape(1, dout))
        packed += [wp.astype(jnp.bfloat16), bp]
    return packed


@functools.partial(jax.jit, static_argnames=("tb_max",))
def ae_forward(x_nchw, packed_params, *, tb_max=1024):
    b = x_nchw.shape[0]
    out_dtype = x_nchw.dtype
    din, dout = DIMS[0], DIMS[-1]

    x_flat = x_nchw.reshape(b, din)

    tb, pb, steps = _choose_tiling(b, tb_max)

    # Batch pad (if any) doubles as the bf16 staging cast: the kernel consumes
    # bf16 directly, halving the input DMA bytes.
    if pb == b:
        x_in = x_flat.astype(jnp.bfloat16)
    else:
        x_in = (jnp.zeros((pb, din), jnp.bfloat16)
                .at[:b].set(x_flat.astype(jnp.bfloat16)))

    grid = (steps,)

    x_spec = pl.BlockSpec((tb, din), lambda i: (i, 0))
    o_spec = pl.BlockSpec((tb, dout), lambda i: (i, 0))
    # Weights/biases: full-array blocks with a constant index_map so they are
    # fetched once and stay resident in VMEM across the batch grid.
    param_specs = [pl.BlockSpec(p.shape, lambda i: (0, 0)) for p in packed_params]

    out_pad = pl.pallas_call(
        ae_kernel,
        out_shape=jax.ShapeDtypeStruct((pb, dout), jnp.float32),
        grid=grid,
        in_specs=[x_spec] + param_specs,
        out_specs=o_spec,
        compiler_params=pltpu.CompilerParams(
            dimension_semantics=("parallel",),      # megacore split on v7x
            vmem_limit_bytes=48 * 1024 * 1024,      # >32 MiB default, <64 MiB v7x
        ),
    )(x_in, *packed_params)

    # Only a row slice remains (output is already 784-wide).
    return out_pad[:b].astype(out_dtype).reshape(b, 1, 28, 28)


# ---------------------------------------------------------------------------
# Pure-JAX references for the self-test.
# ---------------------------------------------------------------------------
def ref_forward_packed(x_nchw, packed_params):
    """Mirrors the kernel math (padded hidden dims, bf16 operands, f32 acc)."""
    b = x_nchw.shape[0]
    h = x_nchw.reshape(b, DIMS[0]).astype(jnp.bfloat16)
    for i in range(5):
        w, bias = packed_params[2 * i], packed_params[2 * i + 1]
        y = jnp.dot(h.astype(jnp.float32), w.astype(jnp.float32)) + bias
        h = jnp.maximum(y, 0.0).astype(jnp.bfloat16)
    w6, b6 = packed_params[10], packed_params[11]
    y = jnp.dot(h.astype(jnp.float32), w6.astype(jnp.float32)) + b6
    y = jax.nn.sigmoid(y)
    return y.reshape(b, 1, 28, 28).astype(x_nchw.dtype)


def ref_forward_spec(x_nchw, params):
    """Original module semantics, full f32."""
    b = x_nchw.shape[0]
    h = x_nchw.reshape(b, DIMS[0]).astype(jnp.float32)
    for i in range(5):
        w, bias = params[2 * i], params[2 * i + 1]
        h = jnp.maximum(h @ w + bias, 0.0)
    y = jax.nn.sigmoid(h @ params[10] + params[11])
    return y.reshape(b, 1, 28, 28).astype(x_nchw.dtype)


if __name__ == "__main__":
    key = jax.random.PRNGKey(0)
    kx, kp = jax.random.split(key)

    batch = 2
    x = jax.random.uniform(kx, (batch, 1, 28, 28), jnp.float32)
    params = init_params(kp)
    packed = pack_params(params)

    out = ae_forward(x, packed)
    out = jax.block_until_ready(out)

    assert out.shape == (batch, 1, 28, 28), out.shape
    assert out.dtype == x.dtype

    # Matched-math reference (same bf16 operands / padding as the kernel).
    # Tolerance covers the approx-reciprocal sigmoid epilogue.
    ref_bf16 = ref_forward_packed(x, packed)
    err_bf16 = float(jnp.max(jnp.abs(out - ref_bf16)))
    assert err_bf16 < 5e-3, f"kernel vs bf16-math reference: max|diff|={err_bf16}"

    # Loose check against the full-f32 module semantics (bf16 rounding).
    ref_f32 = ref_forward_spec(x, params)
    err_f32 = float(jnp.max(jnp.abs(out - ref_f32)))
    assert err_f32 < 3e-2, f"kernel vs f32 spec reference: max|diff|={err_f32}"

    print("KERNEL_OK")
</pallas_src>

<mosaic_0001>
module attributes {stable_mosaic.version = 11 : i64} {
  func.func @ae_kernel(%arg0: i32, %arg1: memref<8x784xbf16, #tpu.memory_space<vmem>>, %arg2: memref<784x256xbf16, #tpu.memory_space<vmem>>, %arg3: memref<1x256xf32, #tpu.memory_space<vmem>>, %arg4: memref<256x128xbf16, #tpu.memory_space<vmem>>, %arg5: memref<1x128xf32, #tpu.memory_space<vmem>>, %arg6: memref<128x128xbf16, #tpu.memory_space<vmem>>, %arg7: memref<1x128xf32, #tpu.memory_space<vmem>>, %arg8: memref<128x128xbf16, #tpu.memory_space<vmem>>, %arg9: memref<1x128xf32, #tpu.memory_space<vmem>>, %arg10: memref<128x256xbf16, #tpu.memory_space<vmem>>, %arg11: memref<1x256xf32, #tpu.memory_space<vmem>>, %arg12: memref<256x784xbf16, #tpu.memory_space<vmem>>, %arg13: memref<1x784xf32, #tpu.memory_space<vmem>>, %arg14: memref<8x784xf32, #tpu.memory_space<vmem>>) attributes {dimension_semantics = [#tpu.dimension_semantics<parallel>], iteration_bounds = array<i64: 1>, scalar_prefetch = 0 : i64, scratch_operands = 0 : i64, tpu.core_type = #tpu.core_type<tc>, window_params = [{transform_indices = @transform_0, window_bounds = array<i64: 8, 784>}, {pipeline_mode = #tpu.pipeline_mode<synchronous>, transform_indices = @transform_1, window_bounds = array<i64: 784, 256>}, {pipeline_mode = #tpu.pipeline_mode<synchronous>, transform_indices = @transform_2, window_bounds = array<i64: 1, 256>}, {pipeline_mode = #tpu.pipeline_mode<synchronous>, transform_indices = @transform_3, window_bounds = array<i64: 256, 128>}, {pipeline_mode = #tpu.pipeline_mode<synchronous>, transform_indices = @transform_4, window_bounds = array<i64: 1, 128>}, {pipeline_mode = #tpu.pipeline_mode<synchronous>, transform_indices = @transform_5, window_bounds = array<i64: 128, 128>}, {pipeline_mode = #tpu.pipeline_mode<synchronous>, transform_indices = @transform_6, window_bounds = array<i64: 1, 128>}, {pipeline_mode = #tpu.pipeline_mode<synchronous>, transform_indices = @transform_7, window_bounds = array<i64: 128, 128>}, {pipeline_mode = #tpu.pipeline_mode<synchronous>, transform_indices = @transform_8, window_bounds = array<i64: 1, 128>}, {pipeline_mode = #tpu.pipeline_mode<synchronous>, transform_indices = @transform_9, window_bounds = array<i64: 128, 256>}, {pipeline_mode = #tpu.pipeline_mode<synchronous>, transform_indices = @transform_10, window_bounds = array<i64: 1, 256>}, {pipeline_mode = #tpu.pipeline_mode<synchronous>, transform_indices = @transform_11, window_bounds = array<i64: 256, 784>}, {pipeline_mode = #tpu.pipeline_mode<synchronous>, transform_indices = @transform_12, window_bounds = array<i64: 1, 784>}, {transform_indices = @transform_13, window_bounds = array<i64: 8, 784>}]} {
    %c0 = arith.constant 0 : index
    %c0_0 = arith.constant 0 : index
    %0 = vector.load %arg1[%c0, %c0_0] : memref<8x784xbf16, #tpu.memory_space<vmem>>, vector<8x784xbf16>
    %c0_1 = arith.constant 0 : index
    %c0_2 = arith.constant 0 : index
    %1 = vector.load %arg2[%c0_1, %c0_2] : memref<784x256xbf16, #tpu.memory_space<vmem>>, vector<784x256xbf16>
    %cst = arith.constant dense<0.000000e+00> : vector<8x256xf32>
    %2 = tpu.matmul %0, %1, %cst {dimension_numbers = #tpu.dot_dimension_numbers<[1], [0], [0], [1], [0, 0, 1, 1], [], []>} : vector<8x784xbf16>, vector<784x256xbf16>, vector<8x256xf32> -> vector<8x256xf32>
    %c0_3 = arith.constant 0 : index
    %c0_4 = arith.constant 0 : index
    %3 = vector.load %arg3[%c0_3, %c0_4] : memref<1x256xf32, #tpu.memory_space<vmem>>, vector<1x256xf32>
    %4 = vector.broadcast %3 : vector<1x256xf32> to vector<8x256xf32>
    %5 = arith.addf %2, %4 : vector<8x256xf32>
    %cst_5 = arith.constant 0.000000e+00 : f32
    %6 = vector.broadcast %cst_5 : f32 to vector<8x256xf32>
    %7 = arith.maximumf %5, %6 : vector<8x256xf32>
    %8 = arith.truncf %7 : vector<8x256xf32> to vector<8x256xbf16>
    %c0_6 = arith.constant 0 : index
    %c0_7 = arith.constant 0 : index
    %9 = vector.load %arg4[%c0_6, %c0_7] : memref<256x128xbf16, #tpu.memory_space<vmem>>, vector<256x128xbf16>
    %cst_8 = arith.constant dense<0.000000e+00> : vector<8x128xf32>
    %10 = tpu.matmul %8, %9, %cst_8 {dimension_numbers = #tpu.dot_dimension_numbers<[1], [0], [0], [1], [0, 0, 1, 1], [], []>} : vector<8x256xbf16>, vector<256x128xbf16>, vector<8x128xf32> -> vector<8x128xf32>
    %c0_9 = arith.constant 0 : index
    %c0_10 = arith.constant 0 : index
    %11 = vector.load %arg5[%c0_9, %c0_10] : memref<1x128xf32, #tpu.memory_space<vmem>>, vector<1x128xf32>
    %12 = vector.broadcast %11 : vector<1x128xf32> to vector<8x128xf32>
    %13 = arith.addf %10, %12 : vector<8x128xf32>
    %cst_11 = arith.constant 0.000000e+00 : f32
    %14 = vector.broadcast %cst_11 : f32 to vector<8x128xf32>
    %15 = arith.maximumf %13, %14 : vector<8x128xf32>
    %16 = arith.truncf %15 : vector<8x128xf32> to vector<8x128xbf16>
    %c0_12 = arith.constant 0 : index
    %c0_13 = arith.constant 0 : index
    %17 = vector.load %arg6[%c0_12, %c0_13] : memref<128x128xbf16, #tpu.memory_space<vmem>>, vector<128x128xbf16>
    %cst_14 = arith.constant dense<0.000000e+00> : vector<8x128xf32>
    %18 = tpu.matmul %16, %17, %cst_14 {dimension_numbers = #tpu.dot_dimension_numbers<[1], [0], [0], [1], [0, 0, 1, 1], [], []>} : vector<8x128xbf16>, vector<128x128xbf16>, vector<8x128xf32> -> vector<8x128xf32>
    %c0_15 = arith.constant 0 : index
    %c0_16 = arith.constant 0 : index
    %19 = vector.load %arg7[%c0_15, %c0_16] : memref<1x128xf32, #tpu.memory_space<vmem>>, vector<1x128xf32>
    %20 = vector.broadcast %19 : vector<1x128xf32> to vector<8x128xf32>
    %21 = arith.addf %18, %20 : vector<8x128xf32>
    %cst_17 = arith.constant 0.000000e+00 : f32
    %22 = vector.broadcast %cst_17 : f32 to vector<8x128xf32>
    %23 = arith.maximumf %21, %22 : vector<8x128xf32>
    %24 = arith.truncf %23 : vector<8x128xf32> to vector<8x128xbf16>
    %c0_18 = arith.constant 0 : index
    %c0_19 = arith.constant 0 : index
    %25 = vector.load %arg8[%c0_18, %c0_19] : memref<128x128xbf16, #tpu.memory_space<vmem>>, vector<128x128xbf16>
    %cst_20 = arith.constant dense<0.000000e+00> : vector<8x128xf32>
    %26 = tpu.matmul %24, %25, %cst_20 {dimension_numbers = #tpu.dot_dimension_numbers<[1], [0], [0], [1], [0, 0, 1, 1], [], []>} : vector<8x128xbf16>, vector<128x128xbf16>, vector<8x128xf32> -> vector<8x128xf32>
    %c0_21 = arith.constant 0 : index
    %c0_22 = arith.constant 0 : index
    %27 = vector.load %arg9[%c0_21, %c0_22] : memref<1x128xf32, #tpu.memory_space<vmem>>, vector<1x128xf32>
    %28 = vector.broadcast %27 : vector<1x128xf32> to vector<8x128xf32>
    %29 = arith.addf %26, %28 : vector<8x128xf32>
    %cst_23 = arith.constant 0.000000e+00 : f32
    %30 = vector.broadcast %cst_23 : f32 to vector<8x128xf32>
    %31 = arith.maximumf %29, %30 : vector<8x128xf32>
    %32 = arith.truncf %31 : vector<8x128xf32> to vector<8x128xbf16>
    %c0_24 = arith.constant 0 : index
    %c0_25 = arith.constant 0 : index
    %33 = vector.load %arg10[%c0_24, %c0_25] : memref<128x256xbf16, #tpu.memory_space<vmem>>, vector<128x256xbf16>
    %cst_26 = arith.constant dense<0.000000e+00> : vector<8x256xf32>
    %34 = tpu.matmul %32, %33, %cst_26 {dimension_numbers = #tpu.dot_dimension_numbers<[1], [0], [0], [1], [0, 0, 1, 1], [], []>} : vector<8x128xbf16>, vector<128x256xbf16>, vector<8x256xf32> -> vector<8x256xf32>
    %c0_27 = arith.constant 0 : index
    %c0_28 = arith.constant 0 : index
    %35 = vector.load %arg11[%c0_27, %c0_28] : memref<1x256xf32, #tpu.memory_space<vmem>>, vector<1x256xf32>
    %36 = vector.broadcast %35 : vector<1x256xf32> to vector<8x256xf32>
    %37 = arith.addf %34, %36 : vector<8x256xf32>
    %cst_29 = arith.constant 0.000000e+00 : f32
    %38 = vector.broadcast %cst_29 : f32 to vector<8x256xf32>
    %39 = arith.maximumf %37, %38 : vector<8x256xf32>
    %40 = arith.truncf %39 : vector<8x256xf32> to vector<8x256xbf16>
    %c0_30 = arith.constant 0 : index
    %c0_31 = arith.constant 0 : index
    %41 = vector.load %arg12[%c0_30, %c0_31] : memref<256x784xbf16, #tpu.memory_space<vmem>>, vector<256x784xbf16>
    %cst_32 = arith.constant dense<0.000000e+00> : vector<8x784xf32>
    %42 = tpu.matmul %40, %41, %cst_32 {dimension_numbers = #tpu.dot_dimension_numbers<[1], [0], [0], [1], [0, 0, 1, 1], [], []>} : vector<8x256xbf16>, vector<256x784xbf16>, vector<8x784xf32> -> vector<8x784xf32>
    %c0_33 = arith.constant 0 : index
    %c0_34 = arith.constant 0 : index
    %43 = vector.load %arg13[%c0_33, %c0_34] : memref<1x784xf32, #tpu.memory_space<vmem>>, vector<1x784xf32>
    %44 = vector.broadcast %43 : vector<1x784xf32> to vector<8x784xf32>
    %45 = arith.addf %42, %44 : vector<8x784xf32>
    %cst_35 = arith.constant 0.000000e+00 : f32
    %46 = vector.broadcast %cst_35 : f32 to vector<8x784xf32>
    %47 = arith.subf %46, %45 : vector<8x784xf32>
    %48 = math.exp %47 : vector<8x784xf32>
    %cst_36 = arith.constant 1.000000e+00 : f32
    %49 = vector.broadcast %cst_36 : f32 to vector<8x784xf32>
    %50 = arith.addf %49, %48 : vector<8x784xf32>
    %51 = tpu.reciprocal %50 {approx = true} : vector<8x784xf32> -> vector<8x784xf32>
    %c0_37 = arith.constant 0 : index
    %c0_38 = arith.constant 0 : index
    %52 = vector.load %arg14[%c0_37, %c0_38] : memref<8x784xf32, #tpu.memory_space<vmem>>, vector<8x784xf32>
    tpu.vector_store %arg14[%c0_37, %c0_38], %51 {strides = array<i32>} : memref<8x784xf32, #tpu.memory_space<vmem>>, vector<8x784xf32>,
    return
  }
  func.func @transform_0(%arg0: i32) -> (i32, i32) {
    %c0_i32 = arith.constant 0 : i32
    %c0_i32_0 = arith.constant 0 : i32
    return %arg0, %c0_i32 : i32, i32
  }
  func.func @transform_1(%arg0: i32) -> (i32, i32) {
    %c0_i32 = arith.constant 0 : i32
    %c0_i32_0 = arith.constant 0 : i32
    %c0_i32_1 = arith.constant 0 : i32
    return %c0_i32, %c0_i32_0 : i32, i32
  }
  func.func @transform_2(%arg0: i32) -> (i32, i32) {
    %c0_i32 = arith.constant 0 : i32
    %c0_i32_0 = arith.constant 0 : i32
    %c0_i32_1 = arith.constant 0 : i32
    return %c0_i32, %c0_i32_0 : i32, i32
  }
  func.func @transform_3(%arg0: i32) -> (i32, i32) {
    %c0_i32 = arith.constant 0 : i32
    %c0_i32_0 = arith.constant 0 : i32
    %c0_i32_1 = arith.constant 0 : i32
    return %c0_i32, %c0_i32_0 : i32, i32
  }
  func.func @transform_4(%arg0: i32) -> (i32, i32) {
    %c0_i32 = arith.constant 0 : i32
    %c0_i32_0 = arith.constant 0 : i32
    %c0_i32_1 = arith.constant 0 : i32
    return %c0_i32, %c0_i32_0 : i32, i32
  }
  func.func @transform_5(%arg0: i32) -> (i32, i32) {
    %c0_i32 = arith.constant 0 : i32
    %c0_i32_0 = arith.constant 0 : i32
    %c0_i32_1 = arith.constant 0 : i32
    return %c0_i32, %c0_i32_0 : i32, i32
  }
  func.func @transform_6(%arg0: i32) -> (i32, i32) {
    %c0_i32 = arith.constant 0 : i32
    %c0_i32_0 = arith.constant 0 : i32
    %c0_i32_1 = arith.constant 0 : i32
    return %c0_i32, %c0_i32_0 : i32, i32
  }
  func.func @transform_7(%arg0: i32) -> (i32, i32) {
    %c0_i32 = arith.constant 0 : i32
    %c0_i32_0 = arith.constant 0 : i32
    %c0_i32_1 = arith.constant 0 : i32
    return %c0_i32, %c0_i32_0 : i32, i32
  }
  func.func @transform_8(%arg0: i32) -> (i32, i32) {
    %c0_i32 = arith.constant 0 : i32
    %c0_i32_0 = arith.constant 0 : i32
    %c0_i32_1 = arith.constant 0 : i32
    return %c0_i32, %c0_i32_0 : i32, i32
  }
  func.func @transform_9(%arg0: i32) -> (i32, i32) {
    %c0_i32 = arith.constant 0 : i32
    %c0_i32_0 = arith.constant 0 : i32
    %c0_i32_1 = arith.constant 0 : i32
    return %c0_i32, %c0_i32_0 : i32, i32
  }
  func.func @transform_10(%arg0: i32) -> (i32, i32) {
    %c0_i32 = arith.constant 0 : i32
    %c0_i32_0 = arith.constant 0 : i32
    %c0_i32_1 = arith.constant 0 : i32
    return %c0_i32, %c0_i32_0 : i32, i32
  }
  func.func @transform_11(%arg0: i32) -> (i32, i32) {
    %c0_i32 = arith.constant 0 : i32
    %c0_i32_0 = arith.constant 0 : i32
    %c0_i32_1 = arith.constant 0 : i32
    return %c0_i32, %c0_i32_0 : i32, i32
  }
  func.func @transform_12(%arg0: i32) -> (i32, i32) {
    %c0_i32 = arith.constant 0 : i32
    %c0_i32_0 = arith.constant 0 : i32
    %c0_i32_1 = arith.constant 0 : i32
    return %c0_i32, %c0_i32_0 : i32, i32
  }
  func.func @transform_13(%arg0: i32) -> (i32, i32) {
    %c0_i32 = arith.constant 0 : i32
    %c0_i32_0 = arith.constant 0 : i32
    return %arg0, %c0_i32 : i32, i32
  }
}

</mosaic_0001>

<llo_original>
// kernel: ae_forward.1
$region0: #{ae_forward.1}
  #allocation0 [shape = 'u32[]', space=smem, size = 0x4, offset = 0x4, fixed_abs, tag = 'smem constant byte address 0x4 - core index']
  #allocation1 [shape = 'u32[72,128]{1,0:T(1,128)}', space=vmem, size = 0x9000, scoped, tag = 'internal scratch']
  %s0 = inlined_call_operand.vmem [shape: bf16[8,784], index: 0, kind: input, shape index: {}]
  %s1 = inlined_call_operand.vmem [shape: bf16[784,256], index: 1, kind: input, shape index: {}]
  %s2 = inlined_call_operand.vmem [shape: f32[1,256], index: 2, kind: input, shape index: {}]
  %s3 = inlined_call_operand.vmem [shape: bf16[256,128], index: 3, kind: input, shape index: {}]
  %s4 = inlined_call_operand.vmem [shape: f32[1,128], index: 4, kind: input, shape index: {}]
  %s5 = inlined_call_operand.vmem [shape: bf16[128,128], index: 5, kind: input, shape index: {}]
  %s6 = inlined_call_operand.vmem [shape: f32[1,128], index: 6, kind: input, shape index: {}]
  %s7 = inlined_call_operand.vmem [shape: bf16[128,128], index: 7, kind: input, shape index: {}]
  %s8 = inlined_call_operand.vmem [shape: f32[1,128], index: 8, kind: input, shape index: {}]
  %s9 = inlined_call_operand.vmem [shape: bf16[128,256], index: 9, kind: input, shape index: {}]
  %s10 = inlined_call_operand.vmem [shape: f32[1,256], index: 10, kind: input, shape index: {}]
  %s11 = inlined_call_operand.vmem [shape: bf16[256,784], index: 11, kind: input, shape index: {}]
  %s12 = inlined_call_operand.vmem [shape: f32[1,784], index: 12, kind: input, shape index: {}]
  %s13 = inlined_call_operand.vmem [shape: f32[8,784], index: 13, kind: output, shape index: {}]
  %s14 = sld [smem:[#allocation0]]
  $region62: #{ae_forward.1} parent=0
    _
  %s16 = ssub.s32 1, %s14
  %s17 = scalar_select 0, %s16, %s14
  // Predicated region
  $region2: #{ae_forward.1} parent=0 // pred_check
    _
  $region3: #{ae_forward.1} parent=0 // pred_check_branch
    %19 = sbr.rel (0) target = $region5
  $region4: #{ae_forward.1} parent=0 // pred_region
    _
  $region5: #{ae_forward.1} parent=0 // pred_fallthru
    _
  // Predicated region
  $region6: #{ae_forward.1} parent=0 // pred_check
    _
  $region7: #{ae_forward.1} parent=0 // pred_check_branch
    %21 = sbr.rel (0) target = $region9
  $region8: #{ae_forward.1} parent=0 // pred_region
    _
  $region9: #{ae_forward.1} parent=0 // pred_fallthru
    _
  // Predicated region
  $region10: #{ae_forward.1} parent=0 // pred_check
    _
  $region11: #{ae_forward.1} parent=0 // pred_check_branch
    %23 = sbr.rel (0) target = $region13
  $region12: #{ae_forward.1} parent=0 // pred_region
    _
  $region13: #{ae_forward.1} parent=0 // pred_fallthru
    _
  // Predicated region
  $region14: #{ae_forward.1} parent=0 // pred_check
    _
  $region15: #{ae_forward.1} parent=0 // pred_check_branch
    %25 = sbr.rel (0) target = $region17
  $region16: #{ae_forward.1} parent=0 // pred_region
    _
  $region17: #{ae_forward.1} parent=0 // pred_fallthru
    _
  // Predicated region
  $region18: #{ae_forward.1} parent=0 // pred_check
    _
  $region19: #{ae_forward.1} parent=0 // pred_check_branch
    %27 = sbr.rel (0) target = $region21
  $region20: #{ae_forward.1} parent=0 // pred_region
    _
  $region21: #{ae_forward.1} parent=0 // pred_fallthru
    _
  // Predicated region
  $region22: #{ae_forward.1} parent=0 // pred_check
    _
  $region23: #{ae_forward.1} parent=0 // pred_check_branch
    %29 = sbr.rel (0) target = $region25
  $region24: #{ae_forward.1} parent=0 // pred_region
    _
  $region25: #{ae_forward.1} parent=0 // pred_fallthru
    _
  // Predicated region
  $region26: #{ae_forward.1} parent=0 // pred_check
    _
  $region27: #{ae_forward.1} parent=0 // pred_check_branch
    %31 = sbr.rel (0) target = $region29
  $region28: #{ae_forward.1} parent=0 // pred_region
    _
  $region29: #{ae_forward.1} parent=0 // pred_fallthru
    _
  // Predicated region
  $region30: #{ae_forward.1} parent=0 // pred_check
    _
  $region31: #{ae_forward.1} parent=0 // pred_check_branch
    %33 = sbr.rel (0) target = $region33
  $region32: #{ae_forward.1} parent=0 // pred_region
    _
  $region33: #{ae_forward.1} parent=0 // pred_fallthru
    _
  // Predicated region
  $region34: #{ae_forward.1} parent=0 // pred_check
    _
  $region35: #{ae_forward.1} parent=0 // pred_check_branch
    %35 = sbr.rel (0) target = $region37
  $region36: #{ae_forward.1} parent=0 // pred_region
    _
  $region37: #{ae_forward.1} parent=0 // pred_fallthru
    _
  // Predicated region
  $region38: #{ae_forward.1} parent=0 // pred_check
    _
  $region39: #{ae_forward.1} parent=0 // pred_check_branch
    %37 = sbr.rel (0) target = $region41
  $region40: #{ae_forward.1} parent=0 // pred_region
    _
  $region41: #{ae_forward.1} parent=0 // pred_fallthru
    _
  // Predicated region
  $region42: #{ae_forward.1} parent=0 // pred_check
    _
  $region43: #{ae_forward.1} parent=0 // pred_check_branch
    %39 = sbr.rel (0) target = $region45
  $region44: #{ae_forward.1} parent=0 // pred_region
    _
  $region45: #{ae_forward.1} parent=0 // pred_fallthru
    _
  // Predicated region
  $region46: #{ae_forward.1} parent=0 // pred_check
    _
  $region47: #{ae_forward.1} parent=0 // pred_check_branch
    %41 = sbr.rel (0) target = $region49
  $region48: #{ae_forward.1} parent=0 // pred_region
    _
  $region49: #{ae_forward.1} parent=0 // pred_fallthru
    _
  // Predicated region
  $region50: #{ae_forward.1} parent=0 // pred_check
    _
  $region51: #{ae_forward.1} parent=0 // pred_check_branch
    %43 = sbr.rel (0) target = $region53
  $region52: #{ae_forward.1} parent=0 // pred_region
    _
  $region53: #{ae_forward.1} parent=0 // pred_fallthru
    _
  %v45 = vld [vmem:[%s0] sm:$0xff]
  %v46 = vld [vmem:[%s0 + $0x8] sm:$0xff]
  %v47 = vld [vmem:[%s0 + $0x10] sm:$0xff]
  %v48 = vld [vmem:[%s0 + $0x18] sm:$0xf]
  %v49 = vld [vmem:[%s1] sm:$0xff]
  %v50 = vld [vmem:[%s1 + $0x8] sm:$0xff]
  %v51 = vld [vmem:[%s1 + $0x10] sm:$0xff]
  %v52 = vld [vmem:[%s1 + $0x18] sm:$0xff]
  %v53 = vld [vmem:[%s1 + $0x20] sm:$0xff]
  %v54 = vld [vmem:[%s1 + $0x28] sm:$0xff]
  %v55 = vld [vmem:[%s1 + $0x30] sm:$0xff]
  %v56 = vld [vmem:[%s1 + $0x38] sm:$0xff]
  %v57 = vld [vmem:[%s1 + $0x40] sm:$0xff]
  %v58 = vld [vmem:[%s1 + $0x48] sm:$0xff]
  %v59 = vld [vmem:[%s1 + $0x50] sm:$0xff]
  %v60 = vld [vmem:[%s1 + $0x58] sm:$0xff]
  %v61 = vld [vmem:[%s1 + $0x60] sm:$0xff]
  %v62 = vld [vmem:[%s1 + $0x68] sm:$0xff]
  %v63 = vld [vmem:[%s1 + $0x70] sm:$0xff]
  %v64 = vld [vmem:[%s1 + $0x78] sm:$0xff]
  %v65 = vld [vmem:[%s1 + $0x80] sm:$0xff]
  %v66 = vld [vmem:[%s1 + $0x88] sm:$0xff]
  %v67 = vld [vmem:[%s1 + $0x90] sm:$0xff]
  %v68 = vld [vmem:[%s1 + $0x98] sm:$0xff]
  %v69 = vld [vmem:[%s1 + $0xa0] sm:$0xff]
  %v70 = vld [vmem:[%s1 + $0xa8] sm:$0xff]
  %v71 = vld [vmem:[%s1 + $0xb0] sm:$0xff]
  %v72 = vld [vmem:[%s1 + $0xb8] sm:$0xff]
  %v73 = vld [vmem:[%s1 + $0xc0] sm:$0xff]
  %v74 = vld [vmem:[%s1 + $0xc8] sm:$0xff]
  %v75 = vld [vmem:[%s1 + $0xd0] sm:$0xff]
  %v76 = vld [vmem:[%s1 + $0xd8] sm:$0xff]
  %v77 = vld [vmem:[%s1 + $0xe0] sm:$0xff]
  %v78 = vld [vmem:[%s1 + $0xe8] sm:$0xff]
  %v79 = vld [vmem:[%s1 + $0xf0] sm:$0xff]
  %v80 = vld [vmem:[%s1 + $0xf8] sm:$0xff]
  %v81 = vld [vmem:[%s1 + $0x100] sm:$0xff]
  %v82 = vld [vmem:[%s1 + $0x108] sm:$0xff]
  %v83 = vld [vmem:[%s1 + $0x110] sm:$0xff]
  %v84 = vld [vmem:[%s1 + $0x118] sm:$0xff]
  %v85 = vld [vmem:[%s1 + $0x120] sm:$0xff]
  %v86 = vld [vmem:[%s1 + $0x128] sm:$0xff]
  %v87 = vld [vmem:[%s1 + $0x130] sm:$0xff]
  %v88 = vld [vmem:[%s1 + $0x138] sm:$0xff]
  %v89 = vld [vmem:[%s1 + $0x140] sm:$0xff]
  %v90 = vld [vmem:[%s1 + $0x148] sm:$0xff]
  %v91 = vld [vmem:[%s1 + $0x150] sm:$0xff]
  %v92 = vld [vmem:[%s1 + $0x158] sm:$0xff]
  %v93 = vld [vmem:[%s1 + $0x160] sm:$0xff]
  %v94 = vld [vmem:[%s1 + $0x168] sm:$0xff]
  %v95 = vld [vmem:[%s1 + $0x170] sm:$0xff]
  %v96 = vld [vmem:[%s1 + $0x178] sm:$0xff]
  %v97 = vld [vmem:[%s1 + $0x180] sm:$0xff]
  %v98 = vld [vmem:[%s1 + $0x188] sm:$0xff]
  %v99 = vld [vmem:[%s1 + $0x190] sm:$0xff]
  %v100 = vld [vmem:[%s1 + $0x198] sm:$0xff]
  %v101 = vld [vmem:[%s1 + $0x1a0] sm:$0xff]
  %v102 = vld [vmem:[%s1 + $0x1a8] sm:$0xff]
  %v103 = vld [vmem:[%s1 + $0x1b0] sm:$0xff]
  %v104 = vld [vmem:[%s1 + $0x1b8] sm:$0xff]
  %v105 = vld [vmem:[%s1 + $0x1c0] sm:$0xff]
  %v106 = vld [vmem:[%s1 + $0x1c8] sm:$0xff]
  %v107 = vld [vmem:[%s1 + $0x1d0] sm:$0xff]
  %v108 = vld [vmem:[%s1 + $0x1d8] sm:$0xff]
  %v109 = vld [vmem:[%s1 + $0x1e0] sm:$0xff]
  %v110 = vld [vmem:[%s1 + $0x1e8] sm:$0xff]
  %v111 = vld [vmem:[%s1 + $0x1f0] sm:$0xff]
  %v112 = vld [vmem:[%s1 + $0x1f8] sm:$0xff]
  %v113 = vld [vmem:[%s1 + $0x200] sm:$0xff]
  %v114 = vld [vmem:[%s1 + $0x208] sm:$0xff]
  %v115 = vld [vmem:[%s1 + $0x210] sm:$0xff]
  %v116 = vld [vmem:[%s1 + $0x218] sm:$0xff]
  %v117 = vld [vmem:[%s1 + $0x220] sm:$0xff]
  %v118 = vld [vmem:[%s1 + $0x228] sm:$0xff]
  %v119 = vld [vmem:[%s1 + $0x230] sm:$0xff]
  %v120 = vld [vmem:[%s1 + $0x238] sm:$0xff]
  %v121 = vld [vmem:[%s1 + $0x240] sm:$0xff]
  %v122 = vld [vmem:[%s1 + $0x248] sm:$0xff]
  %v123 = vld [vmem:[%s1 + $0x250] sm:$0xff]
  %v124 = vld [vmem:[%s1 + $0x258] sm:$0xff]
  %v125 = vld [vmem:[%s1 + $0x260] sm:$0xff]
  %v126 = vld [vmem:[%s1 + $0x268] sm:$0xff]
  %v127 = vld [vmem:[%s1 + $0x270] sm:$0xff]
  %v128 = vld [vmem:[%s1 + $0x278] sm:$0xff]
  %v129 = vld [vmem:[%s1 + $0x280] sm:$0xff]
  %v130 = vld [vmem:[%s1 + $0x288] sm:$0xff]
  %v131 = vld [vmem:[%s1 + $0x290] sm:$0xff]
  %v132 = vld [vmem:[%s1 + $0x298] sm:$0xff]
  %v133 = vld [vmem:[%s1 + $0x2a0] sm:$0xff]
  %v134 = vld [vmem:[%s1 + $0x2a8] sm:$0xff]
  %v135 = vld [vmem:[%s1 + $0x2b0] sm:$0xff]
  %v136 = vld [vmem:[%s1 + $0x2b8] sm:$0xff]
  %v137 = vld [vmem:[%s1 + $0x2c0] sm:$0xff]
  %v138 = vld [vmem:[%s1 + $0x2c8] sm:$0xff]
  %v139 = vld [vmem:[%s1 + $0x2d0] sm:$0xff]
  %v140 = vld [vmem:[%s1 + $0x2d8] sm:$0xff]
  %v141 = vld [vmem:[%s1 + $0x2e0] sm:$0xff]
  %v142 = vld [vmem:[%s1 + $0x2e8] sm:$0xff]
  %v143 = vld [vmem:[%s1 + $0x2f0] sm:$0xff]
  %v144 = vld [vmem:[%s1 + $0x2f8] sm:$0xff]
  %v145 = vld [vmem:[%s1 + $0x300] sm:$0xff]
  %v146 = vld [vmem:[%s1 + $0x308] sm:$0xff]
  %v147 = vld [vmem:[%s2] sm:$0x3]
  %v149 = vperm.slane %v147, 0
  %v150 = vperm.slane %v147, 1
  %v157 = vunpack.c.l.b16 %v45
  %v158 = vunpack.c.h.b16 %v45
  %v159 = vunpack.c.l.b16 %v46
  %v160 = vunpack.c.h.b16 %v46
  %v161 = vunpack.c.l.b16 %v47
  %v162 = vunpack.c.h.b16 %v47
  %v163 = vunpack.c.l.b16 %v48
  %v164 = vpack.c.b16 %v157, %v157
  %v165 = vpack.c.b16 %v158, %v158
  %v166 = vpack.c.b16 %v159, %v159
  %v167 = vpack.c.b16 %v160, %v160
  %v168 = vpack.c.b16 %v161, %v161
  %v169 = vpack.c.b16 %v162, %v162
  %v170 = vpack.c.b16 %v163, %v163
  %v275 = vunpack.c.l.b16 %v49
  %v276 = vunpack.c.h.b16 %v49
  %v277 = vunpack.c.l.b16 %v50
  %v278 = vunpack.c.h.b16 %v50
  %v279 = vunpack.c.l.b16 %v51
  %v280 = vunpack.c.h.b16 %v51
  %v281 = vunpack.c.l.b16 %v52
  %v282 = vunpack.c.h.b16 %v52
  %v283 = vunpack.c.l.b16 %v53
  %v284 = vunpack.c.h.b16 %v53
  %v285 = vunpack.c.l.b16 %v54
  %v286 = vunpack.c.h.b16 %v54
  %v287 = vunpack.c.l.b16 %v55
  %v288 = vunpack.c.h.b16 %v55
  %v289 = vunpack.c.l.b16 %v56
  %v290 = vunpack.c.h.b16 %v56
  %v291 = vunpack.c.l.b16 %v57
  %v292 = vunpack.c.h.b16 %v57
  %v293 = vunpack.c.l.b16 %v58
  %v294 = vunpack.c.h.b16 %v58
  %v295 = vunpack.c.l.b16 %v59
  %v296 = vunpack.c.h.b16 %v59
  %v297 = vunpack.c.l.b16 %v60
  %v298 = vunpack.c.h.b16 %v60
  %v299 = vunpack.c.l.b16 %v61
  %v300 = vunpack.c.h.b16 %v61
  %v301 = vunpack.c.l.b16 %v62
  %v302 = vunpack.c.h.b16 %v62
  %v303 = vunpack.c.l.b16 %v63
  %v304 = vunpack.c.h.b16 %v63
  %v305 = vunpack.c.l.b16 %v64
  %v306 = vunpack.c.h.b16 %v64
  %v307 = vunpack.c.l.b16 %v65
  %v308 = vunpack.c.h.b16 %v65
  %v309 = vunpack.c.l.b16 %v66
  %v310 = vunpack.c.h.b16 %v66
  %v311 = vunpack.c.l.b16 %v67
  %v312 = vunpack.c.h.b16 %v67
  %v313 = vunpack.c.l.b16 %v68
  %v314 = vunpack.c.h.b16 %v68
  %v315 = vunpack.c.l.b16 %v69
  %v316 = vunpack.c.h.b16 %v69
  %v317 = vunpack.c.l.b16 %v70
  %v318 = vunpack.c.h.b16 %v70
  %v319 = vunpack.c.l.b16 %v71
  %v320 = vunpack.c.h.b16 %v71
  %v321 = vunpack.c.l.b16 %v72
  %v322 = vunpack.c.h.b16 %v72
  %v323 = vunpack.c.l.b16 %v73
  %v324 = vunpack.c.h.b16 %v73
  %v325 = vunpack.c.l.b16 %v74
  %v326 = vunpack.c.h.b16 %v74
  %v327 = vunpack.c.l.b16 %v75
  %v328 = vunpack.c.h.b16 %v75
  %v329 = vunpack.c.l.b16 %v76
  %v330 = vunpack.c.h.b16 %v76
  %v331 = vunpack.c.l.b16 %v77
  %v332 = vunpack.c.h.b16 %v77
  %v333 = vunpack.c.l.b16 %v78
  %v334 = vunpack.c.h.b16 %v78
  %v335 = vunpack.c.l.b16 %v79
  %v336 = vunpack.c.h.b16 %v79
  %v337 = vunpack.c.l.b16 %v80
  %v338 = vunpack.c.h.b16 %v80
  %v339 = vunpack.c.l.b16 %v81
  %v340 = vunpack.c.h.b16 %v81
  %v341 = vunpack.c.l.b16 %v82
  %v342 = vunpack.c.h.b16 %v82
  %v343 = vunpack.c.l.b16 %v83
  %v344 = vunpack.c.h.b16 %v83
  %v345 = vunpack.c.l.b16 %v84
  %v346 = vunpack.c.h.b16 %v84
  %v347 = vunpack.c.l.b16 %v85
  %v348 = vunpack.c.h.b16 %v85
  %v349 = vunpack.c.l.b16 %v86
  %v350 = vunpack.c.h.b16 %v86
  %v351 = vunpack.c.l.b16 %v87
  %v352 = vunpack.c.h.b16 %v87
  %v353 = vunpack.c.l.b16 %v88
  %v354 = vunpack.c.h.b16 %v88
  %v355 = vunpack.c.l.b16 %v89
  %v356 = vunpack.c.h.b16 %v89
  %v357 = vunpack.c.l.b16 %v90
  %v358 = vunpack.c.h.b16 %v90
  %v359 = vunpack.c.l.b16 %v91
  %v360 = vunpack.c.h.b16 %v91
  %v361 = vunpack.c.l.b16 %v92
  %v362 = vunpack.c.h.b16 %v92
  %v363 = vunpack.c.l.b16 %v93
  %v364 = vunpack.c.h.b16 %v93
  %v365 = vunpack.c.l.b16 %v94
  %v366 = vunpack.c.h.b16 %v94
  %v367 = vunpack.c.l.b16 %v95
  %v368 = vunpack.c.h.b16 %v95
  %v369 = vunpack.c.l.b16 %v96
  %v370 = vunpack.c.h.b16 %v96
  %v371 = vunpack.c.l.b16 %v97
  %v372 = vunpack.c.h.b16 %v97
  %v373 = vunpack.c.l.b16 %v98
  %v374 = vunpack.c.h.b16 %v98
  %v375 = vunpack.c.l.b16 %v99
  %v376 = vunpack.c.h.b16 %v99
  %v377 = vunpack.c.l.b16 %v100
  %v378 = vunpack.c.h.b16 %v100
  %v379 = vunpack.c.l.b16 %v101
  %v380 = vunpack.c.h.b16 %v101
  %v381 = vunpack.c.l.b16 %v102
  %v382 = vunpack.c.h.b16 %v102
  %v383 = vunpack.c.l.b16 %v103
  %v384 = vunpack.c.h.b16 %v103
  %v385 = vunpack.c.l.b16 %v104
  %v386 = vunpack.c.h.b16 %v104
  %v387 = vunpack.c.l.b16 %v105
  %v388 = vunpack.c.h.b16 %v105
  %v389 = vunpack.c.l.b16 %v106
  %v390 = vunpack.c.h.b16 %v106
  %v391 = vunpack.c.l.b16 %v107
  %v392 = vunpack.c.h.b16 %v107
  %v393 = vunpack.c.l.b16 %v108
  %v394 = vunpack.c.h.b16 %v108
  %v395 = vunpack.c.l.b16 %v109
  %v396 = vunpack.c.h.b16 %v109
  %v397 = vunpack.c.l.b16 %v110
  %v398 = vunpack.c.h.b16 %v110
  %v399 = vunpack.c.l.b16 %v111
  %v400 = vunpack.c.h.b16 %v111
  %v401 = vunpack.c.l.b16 %v112
  %v402 = vunpack.c.h.b16 %v112
  %v403 = vunpack.c.l.b16 %v113
  %v404 = vunpack.c.h.b16 %v113
  %v405 = vunpack.c.l.b16 %v114
  %v406 = vunpack.c.h.b16 %v114
  %v407 = vunpack.c.l.b16 %v115
  %v408 = vunpack.c.h.b16 %v115
  %v409 = vunpack.c.l.b16 %v116
  %v410 = vunpack.c.h.b16 %v116
  %v411 = vunpack.c.l.b16 %v117
  %v412 = vunpack.c.h.b16 %v117
  %v413 = vunpack.c.l.b16 %v118
  %v414 = vunpack.c.h.b16 %v118
  %v415 = vunpack.c.l.b16 %v119
  %v416 = vunpack.c.h.b16 %v119
  %v417 = vunpack.c.l.b16 %v120
  %v418 = vunpack.c.h.b16 %v120
  %v419 = vunpack.c.l.b16 %v121
  %v420 = vunpack.c.h.b16 %v121
  %v421 = vunpack.c.l.b16 %v122
  %v422 = vunpack.c.h.b16 %v122
  %v423 = vunpack.c.l.b16 %v123
  %v424 = vunpack.c.h.b16 %v123
  %v425 = vunpack.c.l.b16 %v124
  %v426 = vunpack.c.h.b16 %v124
  %v427 = vunpack.c.l.b16 %v125
  %v428 = vunpack.c.h.b16 %v125
  %v429 = vunpack.c.l.b16 %v126
  %v430 = vunpack.c.h.b16 %v126
  %v431 = vunpack.c.l.b16 %v127
  %v432 = vunpack.c.h.b16 %v127
  %v433 = vunpack.c.l.b16 %v128
  %v434 = vunpack.c.h.b16 %v128
  %v435 = vunpack.c.l.b16 %v129
  %v436 = vunpack.c.h.b16 %v129
  %v437 = vunpack.c.l.b16 %v130
  %v438 = vunpack.c.h.b16 %v130
  %v439 = vunpack.c.l.b16 %v131
  %v440 = vunpack.c.h.b16 %v131
  %v441 = vunpack.c.l.b16 %v132
  %v442 = vunpack.c.h.b16 %v132
  %v443 = vunpack.c.l.b16 %v133
  %v444 = vunpack.c.h.b16 %v133
  %v445 = vunpack.c.l.b16 %v134
  %v446 = vunpack.c.h.b16 %v134
  %v447 = vunpack.c.l.b16 %v135
  %v448 = vunpack.c.h.b16 %v135
  %v449 = vunpack.c.l.b16 %v136
  %v450 = vunpack.c.h.b16 %v136
  %v451 = vunpack.c.l.b16 %v137
  %v452 = vunpack.c.h.b16 %v137
  %v453 = vunpack.c.l.b16 %v138
  %v454 = vunpack.c.h.b16 %v138
  %v455 = vunpack.c.l.b16 %v139
  %v456 = vunpack.c.h.b16 %v139
  %v457 = vunpack.c.l.b16 %v140
  %v458 = vunpack.c.h.b16 %v140
  %v459 = vunpack.c.l.b16 %v141
  %v460 = vunpack.c.h.b16 %v141
  %v461 = vunpack.c.l.b16 %v142
  %v462 = vunpack.c.h.b16 %v142
  %v463 = vunpack.c.l.b16 %v143
  %v464 = vunpack.c.h.b16 %v143
  %v465 = vunpack.c.l.b16 %v144
  %v466 = vunpack.c.h.b16 %v144
  %v467 = vunpack.c.l.b16 %v145
  %v468 = vunpack.c.h.b16 %v145
  %v469 = vunpack.c.l.b16 %v146
  %v470 = vunpack.c.h.b16 %v146
  %v471 = vpack.c.b16 %v277, %v275
  %v472 = vpack.c.b16 %v278, %v276
  %v473 = vpack.c.b16 %v281, %v279
  %v474 = vpack.c.b16 %v282, %v280
  %v475 = vpack.c.b16 %v285, %v283
  %v476 = vpack.c.b16 %v286, %v284
  %v477 = vpack.c.b16 %v289, %v287
  %v478 = vpack.c.b16 %v290, %v288
  %v479 = vpack.c.b16 %v293, %v291
  %v480 = vpack.c.b16 %v294, %v292
  %v481 = vpack.c.b16 %v297, %v295
  %v482 = vpack.c.b16 %v298, %v296
  %v483 = vpack.c.b16 %v301, %v299
  %v484 = vpack.c.b16 %v302, %v300
  %v485 = vpack.c.b16 %v305, %v303
  %v486 = vpack.c.b16 %v306, %v304
  %v487 = vpack.c.b16 %v309, %v307
  %v488 = vpack.c.b16 %v310, %v308
  %v489 = vpack.c.b16 %v313, %v311
  %v490 = vpack.c.b16 %v314, %v312
  %v491 = vpack.c.b16 %v317, %v315
  %v492 = vpack.c.b16 %v318, %v316
  %v493 = vpack.c.b16 %v321, %v319
  %v494 = vpack.c.b16 %v322, %v320
  %v495 = vpack.c.b16 %v325, %v323
  %v496 = vpack.c.b16 %v326, %v324
  %v497 = vpack.c.b16 %v329, %v327
  %v498 = vpack.c.b16 %v330, %v328
  %v499 = vpack.c.b16 %v333, %v331
  %v500 = vpack.c.b16 %v334, %v332
  %v501 = vpack.c.b16 %v337, %v335
  %v502 = vpack.c.b16 %v338, %v336
  %v503 = vpack.c.b16 %v341, %v339
  %v504 = vpack.c.b16 %v342, %v340
  %v505 = vpack.c.b16 %v345, %v343
  %v506 = vpack.c.b16 %v346, %v344
  %v507 = vpack.c.b16 %v349, %v347
  %v508 = vpack.c.b16 %v350, %v348
  %v509 = vpack.c.b16 %v353, %v351
  %v510 = vpack.c.b16 %v354, %v352
  %v511 = vpack.c.b16 %v357, %v355
  %v512 = vpack.c.b16 %v358, %v356
  %v513 = vpack.c.b16 %v361, %v359
  %v514 = vpack.c.b16 %v362, %v360
  %v515 = vpack.c.b16 %v365, %v363
  %v516 = vpack.c.b16 %v366, %v364
  %v517 = vpack.c.b16 %v369, %v367
  %v518 = vpack.c.b16 %v370, %v368
  %v519 = vpack.c.b16 %v373, %v371
  %v520 = vpack.c.b16 %v374, %v372
  %v521 = vpack.c.b16 %v377, %v375
  %v522 = vpack.c.b16 %v378, %v376
  %v523 = vpack.c.b16 %v381, %v379
  %v524 = vpack.c.b16 %v382, %v380
  %v525 = vpack.c.b16 %v385, %v383
  %v526 = vpack.c.b16 %v386, %v384
  %v527 = vpack.c.b16 %v389, %v387
  %v528 = vpack.c.b16 %v390, %v388
  %v529 = vpack.c.b16 %v393, %v391
  %v530 = vpack.c.b16 %v394, %v392
  %v531 = vpack.c.b16 %v397, %v395
  %v532 = vpack.c.b16 %v398, %v396
  %v533 = vpack.c.b16 %v401, %v399
  %v534 = vpack.c.b16 %v402, %v400
  %v535 = vpack.c.b16 %v405, %v403
  %v536 = vpack.c.b16 %v406, %v404
  %v537 = vpack.c.b16 %v409, %v407
  %v538 = vpack.c.b16 %v410, %v408
  %v539 = vpack.c.b16 %v413, %v411
  %v540 = vpack.c.b16 %v414, %v412
  %v541 = vpack.c.b16 %v417, %v415
  %v542 = vpack.c.b16 %v418, %v416
  %v543 = vpack.c.b16 %v421, %v419
  %v544 = vpack.c.b16 %v422, %v420
  %v545 = vpack.c.b16 %v425, %v423
  %v546 = vpack.c.b16 %v426, %v424
  %v547 = vpack.c.b16 %v429, %v427
  %v548 = vpack.c.b16 %v430, %v428
  %v549 = vpack.c.b16 %v433, %v431
  %v550 = vpack.c.b16 %v434, %v432
  %v551 = vpack.c.b16 %v437, %v435
  %v552 = vpack.c.b16 %v438, %v436
  %v553 = vpack.c.b16 %v441, %v439
  %v554 = vpack.c.b16 %v442, %v440
  %v555 = vpack.c.b16 %v445, %v443
  %v556 = vpack.c.b16 %v446, %v444
  %v557 = vpack.c.b16 %v449, %v447
  %v558 = vpack.c.b16 %v450, %v448
  %v559 = vpack.c.b16 %v453, %v451
  %v560 = vpack.c.b16 %v454, %v452
  %v561 = vpack.c.b16 %v457, %v455
  %v562 = vpack.c.b16 %v458, %v456
  %v563 = vpack.c.b16 %v461, %v459
  %v564 = vpack.c.b16 %v462, %v460
  %v565 = vpack.c.b16 %v465, %v463
  %v566 = vpack.c.b16 %v466, %v464
  %v567 = vpack.c.b16 %v469, %v467
  %v568 = vpack.c.b16 %v470, %v468
  %vm667 = vcmask 130048
  %v669 = vsel %vm667, %v170, 0
  %671 = vmatpush.bf16.msra.mxu0 %v485
  %672 = vmatpush.bf16.msra.mxu0 %v483
  %673 = vmatpush.bf16.msra.mxu0 %v481
  %674 = vmatpush.bf16.msra.mxu0 %v479
  %675 = vmatpush.bf16.msra.mxu0 %v477
  %676 = vmatpush.bf16.msra.mxu0 %v475
  %677 = vmatpush.bf16.msra.mxu0 %v473
  %678 = vmatpush.bf16.msra.mxu0 %v471
  %679 = vmatmul.bf16.gmra.mxu0 %v164
  %v680 = vpop.f32.mrf.mxu0
  %v681 = vadd.f32 %v149, %v680
  %v682 = vpop.f32.mrf.mxu0
  %683 = vdwg.mxu0
  %684 = vmatpush.bf16.msra.mxu0 %v501
  %685 = vmatpush.bf16.msra.mxu0 %v499
  %686 = vmatpush.bf16.msra.mxu0 %v497
  %687 = vmatpush.bf16.msra.mxu0 %v495
  %688 = vmatpush.bf16.msra.mxu0 %v493
  %689 = vmatpush.bf16.msra.mxu0 %v491
  %690 = vmatpush.bf16.msra.mxu0 %v489
  %691 = vmatpush.bf16.msra.mxu0 %v487
  %692 = vmatmul.bf16.gmra.mxu0 %v165
  %v693 = vpop.f32.mrf.mxu0
  %v694 = vadd.f32 %v681, %v693
  %v695 = vpop.f32.mrf.mxu0
  %696 = vdwg.mxu0
  %697 = vmatpush.bf16.msra.mxu0 %v517
  %698 = vmatpush.bf16.msra.mxu0 %v515
  %699 = vmatpush.bf16.msra.mxu0 %v513
  %700 = vmatpush.bf16.msra.mxu0 %v511
  %701 = vmatpush.bf16.msra.mxu0 %v509
  %702 = vmatpush.bf16.msra.mxu0 %v507
  %703 = vmatpush.bf16.msra.mxu0 %v505
  %704 = vmatpush.bf16.msra.mxu0 %v503
  %705 = vmatmul.bf16.gmra.mxu0 %v166
  %v706 = vpop.f32.mrf.mxu0
  %v707 = vadd.f32 %v694, %v706
  %v708 = vpop.f32.mrf.mxu0
  %709 = vdwg.mxu0
  %710 = vmatpush.bf16.msra.mxu0 %v533
  %711 = vmatpush.bf16.msra.mxu0 %v531
  %712 = vmatpush.bf16.msra.mxu0 %v529
  %713 = vmatpush.bf16.msra.mxu0 %v527
  %714 = vmatpush.bf16.msra.mxu0 %v525
  %715 = vmatpush.bf16.msra.mxu0 %v523
  %716 = vmatpush.bf16.msra.mxu0 %v521
  %717 = vmatpush.bf16.msra.mxu0 %v519
  %718 = vmatmul.bf16.gmra.mxu0 %v167
  %v719 = vpop.f32.mrf.mxu0
  %v720 = vadd.f32 %v707, %v719
  %v721 = vpop.f32.mrf.mxu0
  %722 = vdwg.mxu0
  %723 = vmatpush.bf16.msra.mxu0 %v549
  %724 = vmatpush.bf16.msra.mxu0 %v547
  %725 = vmatpush.bf16.msra.mxu0 %v545
  %726 = vmatpush.bf16.msra.mxu0 %v543
  %727 = vmatpush.bf16.msra.mxu0 %v541
  %728 = vmatpush.bf16.msra.mxu0 %v539
  %729 = vmatpush.bf16.msra.mxu0 %v537
  %730 = vmatpush.bf16.msra.mxu0 %v535
  %731 = vmatmul.bf16.gmra.mxu0 %v168
  %v732 = vpop.f32.mrf.mxu0
  %v733 = vadd.f32 %v720, %v732
  %v734 = vpop.f32.mrf.mxu0
  %735 = vdwg.mxu0
  %736 = vmatpush.bf16.msra.mxu0 %v565
  %737 = vmatpush.bf16.msra.mxu0 %v563
  %738 = vmatpush.bf16.msra.mxu0 %v561
  %739 = vmatpush.bf16.msra.mxu0 %v559
  %740 = vmatpush.bf16.msra.mxu0 %v557
  %741 = vmatpush.bf16.msra.mxu0 %v555
  %742 = vmatpush.bf16.msra.mxu0 %v553
  %743 = vmatpush.bf16.msra.mxu0 %v551
  %744 = vmatmul.bf16.gmra.mxu0 %v169
  %v745 = vpop.f32.mrf.mxu0
  %v746 = vadd.f32 %v733, %v745
  %v747 = vpop.f32.mrf.mxu0
  %748 = vdwg.mxu0
  %749 = vmatpush.bf16.msra.mxu0 0
  %750 = vmatpush.bf16.msra.mxu0 0
  %751 = vmatpush.bf16.msra.mxu0 0
  %752 = vmatpush.bf16.msra.mxu0 0
  %753 = vmatpush.bf16.msra.mxu0 0
  %754 = vmatpush.bf16.msra.mxu0 0
  %755 = vmatpush.bf16.msra.mxu0 0
  %756 = vmatpush.bf16.msra.mxu0 %v567
  %757 = vmatmul.bf16.gmra.mxu0 %v669
  %v758 = vpop.f32.mrf.mxu0
  %v759 = vadd.f32 %v746, %v758
  %v760 = vpop.f32.mrf.mxu0
  %761 = vdwg.mxu0
  %762 = vmatpush.bf16.msra.mxu0 %v486
  %763 = vmatpush.bf16.msra.mxu0 %v484
  %764 = vmatpush.bf16.msra.mxu0 %v482
  %765 = vmatpush.bf16.msra.mxu0 %v480
  %766 = vmatpush.bf16.msra.mxu0 %v478
  %767 = vmatpush.bf16.msra.mxu0 %v476
  %768 = vmatpush.bf16.msra.mxu0 %v474
  %769 = vmatpush.bf16.msra.mxu0 %v472
  %770 = vmatmul.bf16.gmra.mxu0 %v164
  %v771 = vpop.f32.mrf.mxu0
  %v772 = vadd.f32 %v150, %v771
  %v773 = vpop.f32.mrf.mxu0
  %774 = vdwg.mxu0
  %775 = vmatpush.bf16.msra.mxu0 %v502
  %776 = vmatpush.bf16.msra.mxu0 %v500
  %777 = vmatpush.bf16.msra.mxu0 %v498
  %778 = vmatpush.bf16.msra.mxu0 %v496
  %779 = vmatpush.bf16.msra.mxu0 %v494
  %780 = vmatpush.bf16.msra.mxu0 %v492
  %781 = vmatpush.bf16.msra.mxu0 %v490
  %782 = vmatpush.bf16.msra.mxu0 %v488
  %783 = vmatmul.bf16.gmra.mxu0 %v165
  %v784 = vpop.f32.mrf.mxu0
  %v785 = vadd.f32 %v772, %v784
  %v786 = vpop.f32.mrf.mxu0
  %787 = vdwg.mxu0
  %788 = vmatpush.bf16.msra.mxu0 %v518
  %789 = vmatpush.bf16.msra.mxu0 %v516
  %790 = vmatpush.bf16.msra.mxu0 %v514
  %791 = vmatpush.bf16.msra.mxu0 %v512
  %792 = vmatpush.bf16.msra.mxu0 %v510
  %793 = vmatpush.bf16.msra.mxu0 %v508
  %794 = vmatpush.bf16.msra.mxu0 %v506
  %795 = vmatpush.bf16.msra.mxu0 %v504
  %796 = vmatmul.bf16.gmra.mxu0 %v166
  %v797 = vpop.f32.mrf.mxu0
  %v798 = vadd.f32 %v785, %v797
  %v799 = vpop.f32.mrf.mxu0
  %800 = vdwg.mxu0
  %801 = vmatpush.bf16.msra.mxu0 %v534
  %802 = vmatpush.bf16.msra.mxu0 %v532
  %803 = vmatpush.bf16.msra.mxu0 %v530
  %804 = vmatpush.bf16.msra.mxu0 %v528
  %805 = vmatpush.bf16.msra.mxu0 %v526
  %806 = vmatpush.bf16.msra.mxu0 %v524
  %807 = vmatpush.bf16.msra.mxu0 %v522
  %808 = vmatpush.bf16.msra.mxu0 %v520
  %809 = vmatmul.bf16.gmra.mxu0 %v167
  %v810 = vpop.f32.mrf.mxu0
  %v811 = vadd.f32 %v798, %v810
  %v812 = vpop.f32.mrf.mxu0
  %813 = vdwg.mxu0
  %814 = vmatpush.bf16.msra.mxu0 %v550
  %815 = vmatpush.bf16.msra.mxu0 %v548
  %816 = vmatpush.bf16.msra.mxu0 %v546
  %817 = vmatpush.bf16.msra.mxu0 %v544
  %818 = vmatpush.bf16.msra.mxu0 %v542
  %819 = vmatpush.bf16.msra.mxu0 %v540
  %820 = vmatpush.bf16.msra.mxu0 %v538
  %821 = vmatpush.bf16.msra.mxu0 %v536
  %822 = vmatmul.bf16.gmra.mxu0 %v168
  %v823 = vpop.f32.mrf.mxu0
  %v824 = vadd.f32 %v811, %v823
  %v825 = vpop.f32.mrf.mxu0
  %826 = vdwg.mxu0
  %827 = vmatpush.bf16.msra.mxu0 %v566
  %828 = vmatpush.bf16.msra.mxu0 %v564
  %829 = vmatpush.bf16.msra.mxu0 %v562
  %830 = vmatpush.bf16.msra.mxu0 %v560
  %831 = vmatpush.bf16.msra.mxu0 %v558
  %832 = vmatpush.bf16.msra.mxu0 %v556
  %833 = vmatpush.bf16.msra.mxu0 %v554
  %834 = vmatpush.bf16.msra.mxu0 %v552
  %835 = vmatmul.bf16.gmra.mxu0 %v169
  %v836 = vpop.f32.mrf.mxu0
  %v837 = vadd.f32 %v824, %v836
  %v838 = vpop.f32.mrf.mxu0
  %839 = vdwg.mxu0
  %840 = vmatpush.bf16.msra.mxu0 0
  %841 = vmatpush.bf16.msra.mxu0 0
  %842 = vmatpush.bf16.msra.mxu0 0
  %843 = vmatpush.bf16.msra.mxu0 0
  %844 = vmatpush.bf16.msra.mxu0 0
  %845 = vmatpush.bf16.msra.mxu0 0
  %846 = vmatpush.bf16.msra.mxu0 0
  %847 = vmatpush.bf16.msra.mxu0 %v568
  %848 = vmatmul.bf16.gmra.mxu0 %v669
  %v849 = vpop.f32.mrf.mxu0
  %v850 = vadd.f32 %v837, %v849
  %v851 = vpop.f32.mrf.mxu0
  %852 = vdwg.mxu0
  %v853 = vmax.f32 %v759, 0.0
  %v854 = vmax.f32 %v850, 0.0
  %v855 = vpack.c.bf16 %v853, %v853
  %v856 = vpack.c.bf16 %v854, %v854
  %v857 = vld [vmem:[%s3] sm:$0xf]
  %v858 = vld [vmem:[%s3 + $0x4] sm:$0xf]
  %v859 = vld [vmem:[%s3 + $0x8] sm:$0xf]
  %v860 = vld [vmem:[%s3 + $0xc] sm:$0xf]
  %v861 = vld [vmem:[%s3 + $0x10] sm:$0xf]
  %v862 = vld [vmem:[%s3 + $0x14] sm:$0xf]
  %v863 = vld [vmem:[%s3 + $0x18] sm:$0xf]
  %v864 = vld [vmem:[%s3 + $0x1c] sm:$0xf]
  %v865 = vld [vmem:[%s3 + $0x20] sm:$0xf]
  %v866 = vld [vmem:[%s3 + $0x24] sm:$0xf]
  %v867 = vld [vmem:[%s3 + $0x28] sm:$0xf]
  %v868 = vld [vmem:[%s3 + $0x2c] sm:$0xf]
  %v869 = vld [vmem:[%s3 + $0x30] sm:$0xf]
  %v870 = vld [vmem:[%s3 + $0x34] sm:$0xf]
  %v871 = vld [vmem:[%s3 + $0x38] sm:$0xf]
  %v872 = vld [vmem:[%s3 + $0x3c] sm:$0xf]
  %v873 = vld [vmem:[%s3 + $0x40] sm:$0xf]
  %v874 = vld [vmem:[%s3 + $0x44] sm:$0xf]
  %v875 = vld [vmem:[%s3 + $0x48] sm:$0xf]
  %v876 = vld [vmem:[%s3 + $0x4c] sm:$0xf]
  %v877 = vld [vmem:[%s3 + $0x50] sm:$0xf]
  %v878 = vld [vmem:[%s3 + $0x54] sm:$0xf]
  %v879 = vld [vmem:[%s3 + $0x58] sm:$0xf]
  %v880 = vld [vmem:[%s3 + $0x5c] sm:$0xf]
  %v881 = vld [vmem:[%s3 + $0x60] sm:$0xf]
  %v882 = vld [vmem:[%s3 + $0x64] sm:$0xf]
  %v883 = vld [vmem:[%s3 + $0x68] sm:$0xf]
  %v884 = vld [vmem:[%s3 + $0x6c] sm:$0xf]
  %v885 = vld [vmem:[%s3 + $0x70] sm:$0xf]
  %v886 = vld [vmem:[%s3 + $0x74] sm:$0xf]
  %v887 = vld [vmem:[%s3 + $0x78] sm:$0xf]
  %v888 = vld [vmem:[%s3 + $0x7c] sm:$0xf]
  %v889 = vld [vmem:[%s4] sm:$0x1]
  %v891 = vperm.slane %v889, 0
  %v925 = vunpack.c.l.b16 %v857
  %v926 = vunpack.c.l.b16 %v858
  %v927 = vunpack.c.l.b16 %v859
  %v928 = vunpack.c.l.b16 %v860
  %v929 = vunpack.c.l.b16 %v861
  %v930 = vunpack.c.l.b16 %v862
  %v931 = vunpack.c.l.b16 %v863
  %v932 = vunpack.c.l.b16 %v864
  %v933 = vunpack.c.l.b16 %v865
  %v934 = vunpack.c.l.b16 %v866
  %v935 = vunpack.c.l.b16 %v867
  %v936 = vunpack.c.l.b16 %v868
  %v937 = vunpack.c.l.b16 %v869
  %v938 = vunpack.c.l.b16 %v870
  %v939 = vunpack.c.l.b16 %v871
  %v940 = vunpack.c.l.b16 %v872
  %v941 = vunpack.c.l.b16 %v873
  %v942 = vunpack.c.l.b16 %v874
  %v943 = vunpack.c.l.b16 %v875
  %v944 = vunpack.c.l.b16 %v876
  %v945 = vunpack.c.l.b16 %v877
  %v946 = vunpack.c.l.b16 %v878
  %v947 = vunpack.c.l.b16 %v879
  %v948 = vunpack.c.l.b16 %v880
  %v949 = vunpack.c.l.b16 %v881
  %v950 = vunpack.c.l.b16 %v882
  %v951 = vunpack.c.l.b16 %v883
  %v952 = vunpack.c.l.b16 %v884
  %v953 = vunpack.c.l.b16 %v885
  %v954 = vunpack.c.l.b16 %v886
  %v955 = vunpack.c.l.b16 %v887
  %v956 = vunpack.c.l.b16 %v888
  %v957 = vpack.c.b16 %v926, %v925
  %v958 = vpack.c.b16 %v928, %v927
  %v959 = vpack.c.b16 %v930, %v929
  %v960 = vpack.c.b16 %v932, %v931
  %v961 = vpack.c.b16 %v934, %v933
  %v962 = vpack.c.b16 %v936, %v935
  %v963 = vpack.c.b16 %v938, %v937
  %v964 = vpack.c.b16 %v940, %v939
  %v965 = vpack.c.b16 %v942, %v941
  %v966 = vpack.c.b16 %v944, %v943
  %v967 = vpack.c.b16 %v946, %v945
  %v968 = vpack.c.b16 %v948, %v947
  %v969 = vpack.c.b16 %v950, %v949
  %v970 = vpack.c.b16 %v952, %v951
  %v971 = vpack.c.b16 %v954, %v953
  %v972 = vpack.c.b16 %v956, %v955
  %989 = vmatpush.bf16.msra.mxu0 %v964
  %990 = vmatpush.bf16.msra.mxu0 %v963
  %991 = vmatpush.bf16.msra.mxu0 %v962
  %992 = vmatpush.bf16.msra.mxu0 %v961
  %993 = vmatpush.bf16.msra.mxu0 %v960
  %994 = vmatpush.bf16.msra.mxu0 %v959
  %995 = vmatpush.bf16.msra.mxu0 %v958
  %996 = vmatpush.bf16.msra.mxu0 %v957
  %997 = vmatmul.bf16.gmra.mxu0 %v855
  %v998 = vpop.f32.mrf.mxu0
  %v999 = vadd.f32 %v891, %v998
  %v1000 = vpop.f32.mrf.mxu0
  %1001 = vdwg.mxu0
  %1002 = vmatpush.bf16.msra.mxu0 %v972
  %1003 = vmatpush.bf16.msra.mxu0 %v971
  %1004 = vmatpush.bf16.msra.mxu0 %v970
  %1005 = vmatpush.bf16.msra.mxu0 %v969
  %1006 = vmatpush.bf16.msra.mxu0 %v968
  %1007 = vmatpush.bf16.msra.mxu0 %v967
  %1008 = vmatpush.bf16.msra.mxu0 %v966
  %1009 = vmatpush.bf16.msra.mxu0 %v965
  %1010 = vmatmul.bf16.gmra.mxu0 %v856
  %v1011 = vpop.f32.mrf.mxu0
  %v1012 = vadd.f32 %v999, %v1011
  %v1013 = vpop.f32.mrf.mxu0
  %1014 = vdwg.mxu0
  %v1015 = vmax.f32 %v1012, 0.0
  %v1016 = vpack.c.bf16 %v1015, %v1015
  %v1017 = vld [vmem:[%s5] sm:$0xf]
  %v1018 = vld [vmem:[%s5 + $0x4] sm:$0xf]
  %v1019 = vld [vmem:[%s5 + $0x8] sm:$0xf]
  %v1020 = vld [vmem:[%s5 + $0xc] sm:$0xf]
  %v1021 = vld [vmem:[%s5 + $0x10] sm:$0xf]
  %v1022 = vld [vmem:[%s5 + $0x14] sm:$0xf]
  %v1023 = vld [vmem:[%s5 + $0x18] sm:$0xf]
  %v1024 = vld [vmem:[%s5 + $0x1c] sm:$0xf]
  %v1025 = vld [vmem:[%s5 + $0x20] sm:$0xf]
  %v1026 = vld [vmem:[%s5 + $0x24] sm:$0xf]
  %v1027 = vld [vmem:[%s5 + $0x28] sm:$0xf]
  %v1028 = vld [vmem:[%s5 + $0x2c] sm:$0xf]
  %v1029 = vld [vmem:[%s5 + $0x30] sm:$0xf]
  %v1030 = vld [vmem:[%s5 + $0x34] sm:$0xf]
  %v1031 = vld [vmem:[%s5 + $0x38] sm:$0xf]
  %v1032 = vld [vmem:[%s5 + $0x3c] sm:$0xf]
  %v1033 = vld [vmem:[%s6] sm:$0x1]
  %v1035 = vperm.slane %v1033, 0
  %v1053 = vunpack.c.l.b16 %v1017
  %v1054 = vunpack.c.l.b16 %v1018
  %v1055 = vunpack.c.l.b16 %v1019
  %v1056 = vunpack.c.l.b16 %v1020
  %v1057 = vunpack.c.l.b16 %v1021
  %v1058 = vunpack.c.l.b16 %v1022
  %v1059 = vunpack.c.l.b16 %v1023
  %v1060 = vunpack.c.l.b16 %v1024
  %v1061 = vunpack.c.l.b16 %v1025
  %v1062 = vunpack.c.l.b16 %v1026
  %v1063 = vunpack.c.l.b16 %v1027
  %v1064 = vunpack.c.l.b16 %v1028
  %v1065 = vunpack.c.l.b16 %v1029
  %v1066 = vunpack.c.l.b16 %v1030
  %v1067 = vunpack.c.l.b16 %v1031
  %v1068 = vunpack.c.l.b16 %v1032
  %v1069 = vpack.c.b16 %v1054, %v1053
  %v1070 = vpack.c.b16 %v1056, %v1055
  %v1071 = vpack.c.b16 %v1058, %v1057
  %v1072 = vpack.c.b16 %v1060, %v1059
  %v1073 = vpack.c.b16 %v1062, %v1061
  %v1074 = vpack.c.b16 %v1064, %v1063
  %v1075 = vpack.c.b16 %v1066, %v1065
  %v1076 = vpack.c.b16 %v1068, %v1067
  %1085 = vmatpush.bf16.msra.mxu0 %v1076
  %1086 = vmatpush.bf16.msra.mxu0 %v1075
  %1087 = vmatpush.bf16.msra.mxu0 %v1074
  %1088 = vmatpush.bf16.msra.mxu0 %v1073
  %1089 = vmatpush.bf16.msra.mxu0 %v1072
  %1090 = vmatpush.bf16.msra.mxu0 %v1071
  %1091 = vmatpush.bf16.msra.mxu0 %v1070
  %1092 = vmatpush.bf16.msra.mxu0 %v1069
  %1093 = vmatmul.bf16.gmra.mxu0 %v1016
  %v1094 = vpop.f32.mrf.mxu0
  %v1095 = vadd.f32 %v1035, %v1094
  %v1096 = vpop.f32.mrf.mxu0
  %1097 = vdwg.mxu0
  %v1098 = vmax.f32 %v1095, 0.0
  %v1099 = vpack.c.bf16 %v1098, %v1098
  %v1100 = vld [vmem:[%s7] sm:$0xf]
  %v1101 = vld [vmem:[%s7 + $0x4] sm:$0xf]
  %v1102 = vld [vmem:[%s7 + $0x8] sm:$0xf]
  %v1103 = vld [vmem:[%s7 + $0xc] sm:$0xf]
  %v1104 = vld [vmem:[%s7 + $0x10] sm:$0xf]
  %v1105 = vld [vmem:[%s7 + $0x14] sm:$0xf]
  %v1106 = vld [vmem:[%s7 + $0x18] sm:$0xf]
  %v1107 = vld [vmem:[%s7 + $0x1c] sm:$0xf]
  %v1108 = vld [vmem:[%s7 + $0x20] sm:$0xf]
  %v1109 = vld [vmem:[%s7 + $0x24] sm:$0xf]
  %v1110 = vld [vmem:[%s7 + $0x28] sm:$0xf]
  %v1111 = vld [vmem:[%s7 + $0x2c] sm:$0xf]
  %v1112 = vld [vmem:[%s7 + $0x30] sm:$0xf]
  %v1113 = vld [vmem:[%s7 + $0x34] sm:$0xf]
  %v1114 = vld [vmem:[%s7 + $0x38] sm:$0xf]
  %v1115 = vld [vmem:[%s7 + $0x3c] sm:$0xf]
  %v1116 = vld [vmem:[%s8] sm:$0x1]
  %v1118 = vperm.slane %v1116, 0
  %v1136 = vunpack.c.l.b16 %v1100
  %v1137 = vunpack.c.l.b16 %v1101
  %v1138 = vunpack.c.l.b16 %v1102
  %v1139 = vunpack.c.l.b16 %v1103
  %v1140 = vunpack.c.l.b16 %v1104
  %v1141 = vunpack.c.l.b16 %v1105
  %v1142 = vunpack.c.l.b16 %v1106
  %v1143 = vunpack.c.l.b16 %v1107
  %v1144 = vunpack.c.l.b16 %v1108
  %v1145 = vunpack.c.l.b16 %v1109
  %v1146 = vunpack.c.l.b16 %v1110
  %v1147 = vunpack.c.l.b16 %v1111
  %v1148 = vunpack.c.l.b16 %v1112
  %v1149 = vunpack.c.l.b16 %v1113
  %v1150 = vunpack.c.l.b16 %v1114
  %v1151 = vunpack.c.l.b16 %v1115
  %v1152 = vpack.c.b16 %v1137, %v1136
  %v1153 = vpack.c.b16 %v1139, %v1138
  %v1154 = vpack.c.b16 %v1141, %v1140
  %v1155 = vpack.c.b16 %v1143, %v1142
  %v1156 = vpack.c.b16 %v1145, %v1144
  %v1157 = vpack.c.b16 %v1147, %v1146
  %v1158 = vpack.c.b16 %v1149, %v1148
  %v1159 = vpack.c.b16 %v1151, %v1150
  %1168 = vmatpush.bf16.msra.mxu0 %v1159
  %1169 = vmatpush.bf16.msra.mxu0 %v1158
  %1170 = vmatpush.bf16.msra.mxu0 %v1157
  %1171 = vmatpush.bf16.msra.mxu0 %v1156
  %1172 = vmatpush.bf16.msra.mxu0 %v1155
  %1173 = vmatpush.bf16.msra.mxu0 %v1154
  %1174 = vmatpush.bf16.msra.mxu0 %v1153
  %1175 = vmatpush.bf16.msra.mxu0 %v1152
  %1176 = vmatmul.bf16.gmra.mxu0 %v1099
  %v1177 = vpop.f32.mrf.mxu0
  %v1178 = vadd.f32 %v1118, %v1177
  %v1179 = vpop.f32.mrf.mxu0
  %1180 = vdwg.mxu0
  %v1181 = vmax.f32 %v1178, 0.0
  %v1182 = vpack.c.bf16 %v1181, %v1181
  %v1183 = vld [vmem:[%s9] sm:$0xff]
  %v1184 = vld [vmem:[%s9 + $0x8] sm:$0xff]
  %v1185 = vld [vmem:[%s9 + $0x10] sm:$0xff]
  %v1186 = vld [vmem:[%s9 + $0x18] sm:$0xff]
  %v1187 = vld [vmem:[%s9 + $0x20] sm:$0xff]
  %v1188 = vld [vmem:[%s9 + $0x28] sm:$0xff]
  %v1189 = vld [vmem:[%s9 + $0x30] sm:$0xff]
  %v1190 = vld [vmem:[%s9 + $0x38] sm:$0xff]
  %v1191 = vld [vmem:[%s9 + $0x40] sm:$0xff]
  %v1192 = vld [vmem:[%s9 + $0x48] sm:$0xff]
  %v1193 = vld [vmem:[%s9 + $0x50] sm:$0xff]
  %v1194 = vld [vmem:[%s9 + $0x58] sm:$0xff]
  %v1195 = vld [vmem:[%s9 + $0x60] sm:$0xff]
  %v1196 = vld [vmem:[%s9 + $0x68] sm:$0xff]
  %v1197 = vld [vmem:[%s9 + $0x70] sm:$0xff]
  %v1198 = vld [vmem:[%s9 + $0x78] sm:$0xff]
  %v1199 = vld [vmem:[%s10] sm:$0x3]
  %v1201 = vperm.slane %v1199, 0
  %v1202 = vperm.slane %v1199, 1
  %v1221 = vunpack.c.l.b16 %v1183
  %v1222 = vunpack.c.h.b16 %v1183
  %v1223 = vunpack.c.l.b16 %v1184
  %v1224 = vunpack.c.h.b16 %v1184
  %v1225 = vunpack.c.l.b16 %v1185
  %v1226 = vunpack.c.h.b16 %v1185
  %v1227 = vunpack.c.l.b16 %v1186
  %v1228 = vunpack.c.h.b16 %v1186
  %v1229 = vunpack.c.l.b16 %v1187
  %v1230 = vunpack.c.h.b16 %v1187
  %v1231 = vunpack.c.l.b16 %v1188
  %v1232 = vunpack.c.h.b16 %v1188
  %v1233 = vunpack.c.l.b16 %v1189
  %v1234 = vunpack.c.h.b16 %v1189
  %v1235 = vunpack.c.l.b16 %v1190
  %v1236 = vunpack.c.h.b16 %v1190
  %v1237 = vunpack.c.l.b16 %v1191
  %v1238 = vunpack.c.h.b16 %v1191
  %v1239 = vunpack.c.l.b16 %v1192
  %v1240 = vunpack.c.h.b16 %v1192
  %v1241 = vunpack.c.l.b16 %v1193
  %v1242 = vunpack.c.h.b16 %v1193
  %v1243 = vunpack.c.l.b16 %v1194
  %v1244 = vunpack.c.h.b16 %v1194
  %v1245 = vunpack.c.l.b16 %v1195
  %v1246 = vunpack.c.h.b16 %v1195
  %v1247 = vunpack.c.l.b16 %v1196
  %v1248 = vunpack.c.h.b16 %v1196
  %v1249 = vunpack.c.l.b16 %v1197
  %v1250 = vunpack.c.h.b16 %v1197
  %v1251 = vunpack.c.l.b16 %v1198
  %v1252 = vunpack.c.h.b16 %v1198
  %v1253 = vpack.c.b16 %v1223, %v1221
  %v1254 = vpack.c.b16 %v1224, %v1222
  %v1255 = vpack.c.b16 %v1227, %v1225
  %v1256 = vpack.c.b16 %v1228, %v1226
  %v1257 = vpack.c.b16 %v1231, %v1229
  %v1258 = vpack.c.b16 %v1232, %v1230
  %v1259 = vpack.c.b16 %v1235, %v1233
  %v1260 = vpack.c.b16 %v1236, %v1234
  %v1261 = vpack.c.b16 %v1239, %v1237
  %v1262 = vpack.c.b16 %v1240, %v1238
  %v1263 = vpack.c.b16 %v1243, %v1241
  %v1264 = vpack.c.b16 %v1244, %v1242
  %v1265 = vpack.c.b16 %v1247, %v1245
  %v1266 = vpack.c.b16 %v1248, %v1246
  %v1267 = vpack.c.b16 %v1251, %v1249
  %v1268 = vpack.c.b16 %v1252, %v1250
  %1285 = vmatpush.bf16.msra.mxu0 %v1267
  %1286 = vmatpush.bf16.msra.mxu0 %v1265
  %1287 = vmatpush.bf16.msra.mxu0 %v1263
  %1288 = vmatpush.bf16.msra.mxu0 %v1261
  %1289 = vmatpush.bf16.msra.mxu0 %v1259
  %1290 = vmatpush.bf16.msra.mxu0 %v1257
  %1291 = vmatpush.bf16.msra.mxu0 %v1255
  %1292 = vmatpush.bf16.msra.mxu0 %v1253
  %1293 = vmatmul.bf16.gmra.mxu0 %v1182
  %v1294 = vpop.f32.mrf.mxu0
  %v1295 = vadd.f32 %v1201, %v1294
  %v1296 = vpop.f32.mrf.mxu0
  %1297 = vdwg.mxu0
  %1298 = vmatpush.bf16.msra.mxu0 %v1268
  %1299 = vmatpush.bf16.msra.mxu0 %v1266
  %1300 = vmatpush.bf16.msra.mxu0 %v1264
  %1301 = vmatpush.bf16.msra.mxu0 %v1262
  %1302 = vmatpush.bf16.msra.mxu0 %v1260
  %1303 = vmatpush.bf16.msra.mxu0 %v1258
  %1304 = vmatpush.bf16.msra.mxu0 %v1256
  %1305 = vmatpush.bf16.msra.mxu0 %v1254
  %1306 = vmatmul.bf16.gmra.mxu0 %v1182
  %v1307 = vpop.f32.mrf.mxu0
  %v1308 = vadd.f32 %v1202, %v1307
  %v1309 = vpop.f32.mrf.mxu0
  %1310 = vdwg.mxu0
  %v1311 = vmax.f32 %v1295, 0.0
  %v1312 = vmax.f32 %v1308, 0.0
  %v1313 = vpack.c.bf16 %v1311, %v1311
  %v1314 = vpack.c.bf16 %v1312, %v1312
  %v1315 = vld [vmem:[%s11] sm:$0xff]
  %v1316 = vld [vmem:[%s11 + $0x8] sm:$0xff]
  %v1317 = vld [vmem:[%s11 + $0x10] sm:$0xff]
  %v1318 = vld [vmem:[%s11 + $0x18] sm:$0xf]
  %v1319 = vld [vmem:[%s11 + $0x1c] sm:$0xff]
  %v1320 = vld [vmem:[%s11 + $0x24] sm:$0xff]
  %v1321 = vld [vmem:[%s11 + $0x2c] sm:$0xff]
  %v1322 = vld [vmem:[%s11 + $0x34] sm:$0xf]
  %v1323 = vld [vmem:[%s11 + $0x38] sm:$0xff]
  %v1324 = vld [vmem:[%s11 + $0x40] sm:$0xff]
  %v1325 = vld [vmem:[%s11 + $0x48] sm:$0xff]
  %v1326 = vld [vmem:[%s11 + $0x50] sm:$0xf]
  %v1327 = vld [vmem:[%s11 + $0x54] sm:$0xff]
  %v1328 = vld [vmem:[%s11 + $0x5c] sm:$0xff]
  %v1329 = vld [vmem:[%s11 + $0x64] sm:$0xff]
  %v1330 = vld [vmem:[%s11 + $0x6c] sm:$0xf]
  %v1331 = vld [vmem:[%s11 + $0x70] sm:$0xff]
  %v1332 = vld [vmem:[%s11 + $0x78] sm:$0xff]
  %v1333 = vld [vmem:[%s11 + $0x80] sm:$0xff]
  %v1334 = vld [vmem:[%s11 + $0x88] sm:$0xf]
  %v1335 = vld [vmem:[%s11 + $0x8c] sm:$0xff]
  %v1336 = vld [vmem:[%s11 + $0x94] sm:$0xff]
  %v1337 = vld [vmem:[%s11 + $0x9c] sm:$0xff]
  %v1338 = vld [vmem:[%s11 + $0xa4] sm:$0xf]
  %v1339 = vld [vmem:[%s11 + $0xa8] sm:$0xff]
  %v1340 = vld [vmem:[%s11 + $0xb0] sm:$0xff]
  %v1341 = vld [vmem:[%s11 + $0xb8] sm:$0xff]
  %v1342 = vld [vmem:[%s11 + $0xc0] sm:$0xf]
  %v1343 = vld [vmem:[%s11 + $0xc4] sm:$0xff]
  %v1344 = vld [vmem:[%s11 + $0xcc] sm:$0xff]
  %v1345 = vld [vmem:[%s11 + $0xd4] sm:$0xff]
  %v1346 = vld [vmem:[%s11 + $0xdc] sm:$0xf]
  %v1347 = vld [vmem:[%s11 + $0xe0] sm:$0xff]
  %v1348 = vld [vmem:[%s11 + $0xe8] sm:$0xff]
  %v1349 = vld [vmem:[%s11 + $0xf0] sm:$0xff]
  %v1350 = vld [vmem:[%s11 + $0xf8] sm:$0xf]
  %v1351 = vld [vmem:[%s11 + $0xfc] sm:$0xff]
  %v1352 = vld [vmem:[%s11 + $0x104] sm:$0xff]
  %v1353 = vld [vmem:[%s11 + $0x10c] sm:$0xff]
  %v1354 = vld [vmem:[%s11 + $0x114] sm:$0xf]
  %v1355 = vld [vmem:[%s11 + $0x118] sm:$0xff]
  %v1356 = vld [vmem:[%s11 + $0x120] sm:$0xff]
  %v1357 = vld [vmem:[%s11 + $0x128] sm:$0xff]
  %v1358 = vld [vmem:[%s11 + $0x130] sm:$0xf]
  %v1359 = vld [vmem:[%s11 + $0x134] sm:$0xff]
  %v1360 = vld [vmem:[%s11 + $0x13c] sm:$0xff]
  %v1361 = vld [vmem:[%s11 + $0x144] sm:$0xff]
  %v1362 = vld [vmem:[%s11 + $0x14c] sm:$0xf]
  %v1363 = vld [vmem:[%s11 + $0x150] sm:$0xff]
  %v1364 = vld [vmem:[%s11 + $0x158] sm:$0xff]
  %v1365 = vld [vmem:[%s11 + $0x160] sm:$0xff]
  %v1366 = vld [vmem:[%s11 + $0x168] sm:$0xf]
  %v1367 = vld [vmem:[%s11 + $0x16c] sm:$0xff]
  %v1368 = vld [vmem:[%s11 + $0x174] sm:$0xff]
  %v1369 = vld [vmem:[%s11 + $0x17c] sm:$0xff]
  %v1370 = vld [vmem:[%s11 + $0x184] sm:$0xf]
  %v1371 = vld [vmem:[%s11 + $0x188] sm:$0xff]
  %v1372 = vld [vmem:[%s11 + $0x190] sm:$0xff]
  %v1373 = vld [vmem:[%s11 + $0x198] sm:$0xff]
  %v1374 = vld [vmem:[%s11 + $0x1a0] sm:$0xf]
  %v1375 = vld [vmem:[%s11 + $0x1a4] sm:$0xff]
  %v1376 = vld [vmem:[%s11 + $0x1ac] sm:$0xff]
  %v1377 = vld [vmem:[%s11 + $0x1b4] sm:$0xff]
  %v1378 = vld [vmem:[%s11 + $0x1bc] sm:$0xf]
  %v1379 = vld [vmem:[%s11 + $0x1c0] sm:$0xff]
  %v1380 = vld [vmem:[%s11 + $0x1c8] sm:$0xff]
  %v1381 = vld [vmem:[%s11 + $0x1d0] sm:$0xff]
  %v1382 = vld [vmem:[%s11 + $0x1d8] sm:$0xf]
  %v1383 = vld [vmem:[%s11 + $0x1dc] sm:$0xff]
  %v1384 = vld [vmem:[%s11 + $0x1e4] sm:$0xff]
  %v1385 = vld [vmem:[%s11 + $0x1ec] sm:$0xff]
  %v1386 = vld [vmem:[%s11 + $0x1f4] sm:$0xf]
  %v1387 = vld [vmem:[%s11 + $0x1f8] sm:$0xff]
  %v1388 = vld [vmem:[%s11 + $0x200] sm:$0xff]
  %v1389 = vld [vmem:[%s11 + $0x208] sm:$0xff]
  %v1390 = vld [vmem:[%s11 + $0x210] sm:$0xf]
  %v1391 = vld [vmem:[%s11 + $0x214] sm:$0xff]
  %v1392 = vld [vmem:[%s11 + $0x21c] sm:$0xff]
  %v1393 = vld [vmem:[%s11 + $0x224] sm:$0xff]
  %v1394 = vld [vmem:[%s11 + $0x22c] sm:$0xf]
  %v1395 = vld [vmem:[%s11 + $0x230] sm:$0xff]
  %v1396 = vld [vmem:[%s11 + $0x238] sm:$0xff]
  %v1397 = vld [vmem:[%s11 + $0x240] sm:$0xff]
  %v1398 = vld [vmem:[%s11 + $0x248] sm:$0xf]
  %v1399 = vld [vmem:[%s11 + $0x24c] sm:$0xff]
  %v1400 = vld [vmem:[%s11 + $0x254] sm:$0xff]
  %v1401 = vld [vmem:[%s11 + $0x25c] sm:$0xff]
  %v1402 = vld [vmem:[%s11 + $0x264] sm:$0xf]
  %v1403 = vld [vmem:[%s11 + $0x268] sm:$0xff]
  %v1404 = vld [vmem:[%s11 + $0x270] sm:$0xff]
  %v1405 = vld [vmem:[%s11 + $0x278] sm:$0xff]
  %v1406 = vld [vmem:[%s11 + $0x280] sm:$0xf]
  %v1407 = vld [vmem:[%s11 + $0x284] sm:$0xff]
  %v1408 = vld [vmem:[%s11 + $0x28c] sm:$0xff]
  %v1409 = vld [vmem:[%s11 + $0x294] sm:$0xff]
  %v1410 = vld [vmem:[%s11 + $0x29c] sm:$0xf]
  %v1411 = vld [vmem:[%s11 + $0x2a0] sm:$0xff]
  %v1412 = vld [vmem:[%s11 + $0x2a8] sm:$0xff]
  %v1413 = vld [vmem:[%s11 + $0x2b0] sm:$0xff]
  %v1414 = vld [vmem:[%s11 + $0x2b8] sm:$0xf]
  %v1415 = vld [vmem:[%s11 + $0x2bc] sm:$0xff]
  %v1416 = vld [vmem:[%s11 + $0x2c4] sm:$0xff]
  %v1417 = vld [vmem:[%s11 + $0x2cc] sm:$0xff]
  %v1418 = vld [vmem:[%s11 + $0x2d4] sm:$0xf]
  %v1419 = vld [vmem:[%s11 + $0x2d8] sm:$0xff]
  %v1420 = vld [vmem:[%s11 + $0x2e0] sm:$0xff]
  %v1421 = vld [vmem:[%s11 + $0x2e8] sm:$0xff]
  %v1422 = vld [vmem:[%s11 + $0x2f0] sm:$0xf]
  %v1423 = vld [vmem:[%s11 + $0x2f4] sm:$0xff]
  %v1424 = vld [vmem:[%s11 + $0x2fc] sm:$0xff]
  %v1425 = vld [vmem:[%s11 + $0x304] sm:$0xff]
  %v1426 = vld [vmem:[%s11 + $0x30c] sm:$0xf]
  %v1427 = vld [vmem:[%s11 + $0x310] sm:$0xff]
  %v1428 = vld [vmem:[%s11 + $0x318] sm:$0xff]
  %v1429 = vld [vmem:[%s11 + $0x320] sm:$0xff]
  %v1430 = vld [vmem:[%s11 + $0x328] sm:$0xf]
  %v1431 = vld [vmem:[%s11 + $0x32c] sm:$0xff]
  %v1432 = vld [vmem:[%s11 + $0x334] sm:$0xff]
  %v1433 = vld [vmem:[%s11 + $0x33c] sm:$0xff]
  %v1434 = vld [vmem:[%s11 + $0x344] sm:$0xf]
  %v1435 = vld [vmem:[%s11 + $0x348] sm:$0xff]
  %v1436 = vld [vmem:[%s11 + $0x350] sm:$0xff]
  %v1437 = vld [vmem:[%s11 + $0x358] sm:$0xff]
  %v1438 = vld [vmem:[%s11 + $0x360] sm:$0xf]
  %v1439 = vld [vmem:[%s11 + $0x364] sm:$0xff]
  %v1440 = vld [vmem:[%s11 + $0x36c] sm:$0xff]
  %v1441 = vld [vmem:[%s11 + $0x374] sm:$0xff]
  %v1442 = vld [vmem:[%s11 + $0x37c] sm:$0xf]
  %v1443 = vld [vmem:[%s12] sm:$0x7f]
  %v1445 = vperm.slane %v1443, 0
  %v1446 = vperm.slane %v1443, 1
  %v1447 = vperm.slane %v1443, 2
  %v1448 = vperm.slane %v1443, 3
  %v1449 = vperm.slane %v1443, 4
  %v1450 = vperm.slane %v1443, 5
  %v1451 = vperm.slane %v1443, 6
  %v1587 = vunpack.c.l.b16 %v1315
  %v1588 = vunpack.c.h.b16 %v1315
  %v1589 = vunpack.c.l.b16 %v1316
  %v1590 = vunpack.c.h.b16 %v1316
  %v1591 = vunpack.c.l.b16 %v1317
  %v1592 = vunpack.c.h.b16 %v1317
  %v1593 = vunpack.c.l.b16 %v1318
  %v1594 = vunpack.c.l.b16 %v1319
  %v1595 = vunpack.c.h.b16 %v1319
  %v1596 = vunpack.c.l.b16 %v1320
  %v1597 = vunpack.c.h.b16 %v1320
  %v1598 = vunpack.c.l.b16 %v1321
  %v1599 = vunpack.c.h.b16 %v1321
  %v1600 = vunpack.c.l.b16 %v1322
  %v1601 = vunpack.c.l.b16 %v1323
  %v1602 = vunpack.c.h.b16 %v1323
  %v1603 = vunpack.c.l.b16 %v1324
  %v1604 = vunpack.c.h.b16 %v1324
  %v1605 = vunpack.c.l.b16 %v1325
  %v1606 = vunpack.c.h.b16 %v1325
  %v1607 = vunpack.c.l.b16 %v1326
  %v1608 = vunpack.c.l.b16 %v1327
  %v1609 = vunpack.c.h.b16 %v1327
  %v1610 = vunpack.c.l.b16 %v1328
  %v1611 = vunpack.c.h.b16 %v1328
  %v1612 = vunpack.c.l.b16 %v1329
  %v1613 = vunpack.c.h.b16 %v1329
  %v1614 = vunpack.c.l.b16 %v1330
  %v1615 = vunpack.c.l.b16 %v1331
  %v1616 = vunpack.c.h.b16 %v1331
  %v1617 = vunpack.c.l.b16 %v1332
  %v1618 = vunpack.c.h.b16 %v1332
  %v1619 = vunpack.c.l.b16 %v1333
  %v1620 = vunpack.c.h.b16 %v1333
  %v1621 = vunpack.c.l.b16 %v1334
  %v1622 = vunpack.c.l.b16 %v1335
  %v1623 = vunpack.c.h.b16 %v1335
  %v1624 = vunpack.c.l.b16 %v1336
  %v1625 = vunpack.c.h.b16 %v1336
  %v1626 = vunpack.c.l.b16 %v1337
  %v1627 = vunpack.c.h.b16 %v1337
  %v1628 = vunpack.c.l.b16 %v1338
  %v1629 = vunpack.c.l.b16 %v1339
  %v1630 = vunpack.c.h.b16 %v1339
  %v1631 = vunpack.c.l.b16 %v1340
  %v1632 = vunpack.c.h.b16 %v1340
  %v1633 = vunpack.c.l.b16 %v1341
  %v1634 = vunpack.c.h.b16 %v1341
  %v1635 = vunpack.c.l.b16 %v1342
  %v1636 = vunpack.c.l.b16 %v1343
  %v1637 = vunpack.c.h.b16 %v1343
  %v1638 = vunpack.c.l.b16 %v1344
  %v1639 = vunpack.c.h.b16 %v1344
  %v1640 = vunpack.c.l.b16 %v1345
  %v1641 = vunpack.c.h.b16 %v1345
  %v1642 = vunpack.c.l.b16 %v1346
  %v1643 = vunpack.c.l.b16 %v1347
  %v1644 = vunpack.c.h.b16 %v1347
  %v1645 = vunpack.c.l.b16 %v1348
  %v1646 = vunpack.c.h.b16 %v1348
  %v1647 = vunpack.c.l.b16 %v1349
  %v1648 = vunpack.c.h.b16 %v1349
  %v1649 = vunpack.c.l.b16 %v1350
  %v1650 = vunpack.c.l.b16 %v1351
  %v1651 = vunpack.c.h.b16 %v1351
  %v1652 = vunpack.c.l.b16 %v1352
  %v1653 = vunpack.c.h.b16 %v1352
  %v1654 = vunpack.c.l.b16 %v1353
  %v1655 = vunpack.c.h.b16 %v1353
  %v1656 = vunpack.c.l.b16 %v1354
  %v1657 = vunpack.c.l.b16 %v1355
  %v1658 = vunpack.c.h.b16 %v1355
  %v1659 = vunpack.c.l.b16 %v1356
  %v1660 = vunpack.c.h.b16 %v1356
  %v1661 = vunpack.c.l.b16 %v1357
  %v1662 = vunpack.c.h.b16 %v1357
  %v1663 = vunpack.c.l.b16 %v1358
  %v1664 = vunpack.c.l.b16 %v1359
  %v1665 = vunpack.c.h.b16 %v1359
  %v1666 = vunpack.c.l.b16 %v1360
  %v1667 = vunpack.c.h.b16 %v1360
  %v1668 = vunpack.c.l.b16 %v1361
  %v1669 = vunpack.c.h.b16 %v1361
  %v1670 = vunpack.c.l.b16 %v1362
  %v1671 = vunpack.c.l.b16 %v1363
  %v1672 = vunpack.c.h.b16 %v1363
  %v1673 = vunpack.c.l.b16 %v1364
  %v1674 = vunpack.c.h.b16 %v1364
  %v1675 = vunpack.c.l.b16 %v1365
  %v1676 = vunpack.c.h.b16 %v1365
  %v1677 = vunpack.c.l.b16 %v1366
  %v1678 = vunpack.c.l.b16 %v1367
  %v1679 = vunpack.c.h.b16 %v1367
  %v1680 = vunpack.c.l.b16 %v1368
  %v1681 = vunpack.c.h.b16 %v1368
  %v1682 = vunpack.c.l.b16 %v1369
  %v1683 = vunpack.c.h.b16 %v1369
  %v1684 = vunpack.c.l.b16 %v1370
  %v1685 = vunpack.c.l.b16 %v1371
  %v1686 = vunpack.c.h.b16 %v1371
  %v1687 = vunpack.c.l.b16 %v1372
  %v1688 = vunpack.c.h.b16 %v1372
  %v1689 = vunpack.c.l.b16 %v1373
  %v1690 = vunpack.c.h.b16 %v1373
  %v1691 = vunpack.c.l.b16 %v1374
  %v1692 = vunpack.c.l.b16 %v1375
  %v1693 = vunpack.c.h.b16 %v1375
  %v1694 = vunpack.c.l.b16 %v1376
  %v1695 = vunpack.c.h.b16 %v1376
  %v1696 = vunpack.c.l.b16 %v1377
  %v1697 = vunpack.c.h.b16 %v1377
  %v1698 = vunpack.c.l.b16 %v1378
  %v1699 = vunpack.c.l.b16 %v1379
  %v1700 = vunpack.c.h.b16 %v1379
  %v1701 = vunpack.c.l.b16 %v1380
  %v1702 = vunpack.c.h.b16 %v1380
  %v1703 = vunpack.c.l.b16 %v1381
  %v1704 = vunpack.c.h.b16 %v1381
  %v1705 = vunpack.c.l.b16 %v1382
  %v1706 = vunpack.c.l.b16 %v1383
  %v1707 = vunpack.c.h.b16 %v1383
  %v1708 = vunpack.c.l.b16 %v1384
  %v1709 = vunpack.c.h.b16 %v1384
  %v1710 = vunpack.c.l.b16 %v1385
  %v1711 = vunpack.c.h.b16 %v1385
  %v1712 = vunpack.c.l.b16 %v1386
  %v1713 = vunpack.c.l.b16 %v1387
  %v1714 = vunpack.c.h.b16 %v1387
  %v1715 = vunpack.c.l.b16 %v1388
  %v1716 = vunpack.c.h.b16 %v1388
  %v1717 = vunpack.c.l.b16 %v1389
  %v1718 = vunpack.c.h.b16 %v1389
  %v1719 = vunpack.c.l.b16 %v1390
  %v1720 = vunpack.c.l.b16 %v1391
  %v1721 = vunpack.c.h.b16 %v1391
  %v1722 = vunpack.c.l.b16 %v1392
  %v1723 = vunpack.c.h.b16 %v1392
  %v1724 = vunpack.c.l.b16 %v1393
  %v1725 = vunpack.c.h.b16 %v1393
  %v1726 = vunpack.c.l.b16 %v1394
  %v1727 = vunpack.c.l.b16 %v1395
  %v1728 = vunpack.c.h.b16 %v1395
  %v1729 = vunpack.c.l.b16 %v1396
  %v1730 = vunpack.c.h.b16 %v1396
  %v1731 = vunpack.c.l.b16 %v1397
  %v1732 = vunpack.c.h.b16 %v1397
  %v1733 = vunpack.c.l.b16 %v1398
  %v1734 = vunpack.c.l.b16 %v1399
  %v1735 = vunpack.c.h.b16 %v1399
  %v1736 = vunpack.c.l.b16 %v1400
  %v1737 = vunpack.c.h.b16 %v1400
  %v1738 = vunpack.c.l.b16 %v1401
  %v1739 = vunpack.c.h.b16 %v1401
  %v1740 = vunpack.c.l.b16 %v1402
  %v1741 = vunpack.c.l.b16 %v1403
  %v1742 = vunpack.c.h.b16 %v1403
  %v1743 = vunpack.c.l.b16 %v1404
  %v1744 = vunpack.c.h.b16 %v1404
  %v1745 = vunpack.c.l.b16 %v1405
  %v1746 = vunpack.c.h.b16 %v1405
  %v1747 = vunpack.c.l.b16 %v1406
  %v1748 = vunpack.c.l.b16 %v1407
  %v1749 = vunpack.c.h.b16 %v1407
  %v1750 = vunpack.c.l.b16 %v1408
  %v1751 = vunpack.c.h.b16 %v1408
  %v1752 = vunpack.c.l.b16 %v1409
  %v1753 = vunpack.c.h.b16 %v1409
  %v1754 = vunpack.c.l.b16 %v1410
  %v1755 = vunpack.c.l.b16 %v1411
  %v1756 = vunpack.c.h.b16 %v1411
  %v1757 = vunpack.c.l.b16 %v1412
  %v1758 = vunpack.c.h.b16 %v1412
  %v1759 = vunpack.c.l.b16 %v1413
  %v1760 = vunpack.c.h.b16 %v1413
  %v1761 = vunpack.c.l.b16 %v1414
  %v1762 = vunpack.c.l.b16 %v1415
  %v1763 = vunpack.c.h.b16 %v1415
  %v1764 = vunpack.c.l.b16 %v1416
  %v1765 = vunpack.c.h.b16 %v1416
  %v1766 = vunpack.c.l.b16 %v1417
  %v1767 = vunpack.c.h.b16 %v1417
  %v1768 = vunpack.c.l.b16 %v1418
  %v1769 = vunpack.c.l.b16 %v1419
  %v1770 = vunpack.c.h.b16 %v1419
  %v1771 = vunpack.c.l.b16 %v1420
  %v1772 = vunpack.c.h.b16 %v1420
  %v1773 = vunpack.c.l.b16 %v1421
  %v1774 = vunpack.c.h.b16 %v1421
  %v1775 = vunpack.c.l.b16 %v1422
  %v1776 = vunpack.c.l.b16 %v1423
  %v1777 = vunpack.c.h.b16 %v1423
  %v1778 = vunpack.c.l.b16 %v1424
  %v1779 = vunpack.c.h.b16 %v1424
  %v1780 = vunpack.c.l.b16 %v1425
  %v1781 = vunpack.c.h.b16 %v1425
  %v1782 = vunpack.c.l.b16 %v1426
  %v1783 = vunpack.c.l.b16 %v1427
  %v1784 = vunpack.c.h.b16 %v1427
  %v1785 = vunpack.c.l.b16 %v1428
  %v1786 = vunpack.c.h.b16 %v1428
  %v1787 = vunpack.c.l.b16 %v1429
  %v1788 = vunpack.c.h.b16 %v1429
  %v1789 = vunpack.c.l.b16 %v1430
  %v1790 = vunpack.c.l.b16 %v1431
  %v1791 = vunpack.c.h.b16 %v1431
  %v1792 = vunpack.c.l.b16 %v1432
  %v1793 = vunpack.c.h.b16 %v1432
  %v1794 = vunpack.c.l.b16 %v1433
  %v1795 = vunpack.c.h.b16 %v1433
  %v1796 = vunpack.c.l.b16 %v1434
  %v1797 = vunpack.c.l.b16 %v1435
  %v1798 = vunpack.c.h.b16 %v1435
  %v1799 = vunpack.c.l.b16 %v1436
  %v1800 = vunpack.c.h.b16 %v1436
  %v1801 = vunpack.c.l.b16 %v1437
  %v1802 = vunpack.c.h.b16 %v1437
  %v1803 = vunpack.c.l.b16 %v1438
  %v1804 = vunpack.c.l.b16 %v1439
  %v1805 = vunpack.c.h.b16 %v1439
  %v1806 = vunpack.c.l.b16 %v1440
  %v1807 = vunpack.c.h.b16 %v1440
  %v1808 = vunpack.c.l.b16 %v1441
  %v1809 = vunpack.c.h.b16 %v1441
  %v1810 = vunpack.c.l.b16 %v1442
  %v1811 = vpack.c.b16 %v1594, %v1587
  %v1812 = vpack.c.b16 %v1595, %v1588
  %v1813 = vpack.c.b16 %v1596, %v1589
  %v1814 = vpack.c.b16 %v1597, %v1590
  %v1815 = vpack.c.b16 %v1598, %v1591
  %v1816 = vpack.c.b16 %v1599, %v1592
  %v1817 = vpack.c.b16 %v1600, %v1593
  %v1818 = vpack.c.b16 %v1608, %v1601
  %v1819 = vpack.c.b16 %v1609, %v1602
  %v1820 = vpack.c.b16 %v1610, %v1603
  %v1821 = vpack.c.b16 %v1611, %v1604
  %v1822 = vpack.c.b16 %v1612, %v1605
  %v1823 = vpack.c.b16 %v1613, %v1606
  %v1824 = vpack.c.b16 %v1614, %v1607
  %v1825 = vpack.c.b16 %v1622, %v1615
  %v1826 = vpack.c.b16 %v1623, %v1616
  %v1827 = vpack.c.b16 %v1624, %v1617
  %v1828 = vpack.c.b16 %v1625, %v1618
  %v1829 = vpack.c.b16 %v1626, %v1619
  %v1830 = vpack.c.b16 %v1627, %v1620
  %v1831 = vpack.c.b16 %v1628, %v1621
  %v1832 = vpack.c.b16 %v1636, %v1629
  %v1833 = vpack.c.b16 %v1637, %v1630
  %v1834 = vpack.c.b16 %v1638, %v1631
  %v1835 = vpack.c.b16 %v1639, %v1632
  %v1836 = vpack.c.b16 %v1640, %v1633
  %v1837 = vpack.c.b16 %v1641, %v1634
  %v1838 = vpack.c.b16 %v1642, %v1635
  %v1839 = vpack.c.b16 %v1650, %v1643
  %v1840 = vpack.c.b16 %v1651, %v1644
  %v1841 = vpack.c.b16 %v1652, %v1645
  %v1842 = vpack.c.b16 %v1653, %v1646
  %v1843 = vpack.c.b16 %v1654, %v1647
  %v1844 = vpack.c.b16 %v1655, %v1648
  %v1845 = vpack.c.b16 %v1656, %v1649
  %v1846 = vpack.c.b16 %v1664, %v1657
  %v1847 = vpack.c.b16 %v1665, %v1658
  %v1848 = vpack.c.b16 %v1666, %v1659
  %v1849 = vpack.c.b16 %v1667, %v1660
  %v1850 = vpack.c.b16 %v1668, %v1661
  %v1851 = vpack.c.b16 %v1669, %v1662
  %v1852 = vpack.c.b16 %v1670, %v1663
  %v1853 = vpack.c.b16 %v1678, %v1671
  %v1854 = vpack.c.b16 %v1679, %v1672
  %v1855 = vpack.c.b16 %v1680, %v1673
  %v1856 = vpack.c.b16 %v1681, %v1674
  %v1857 = vpack.c.b16 %v1682, %v1675
  %v1858 = vpack.c.b16 %v1683, %v1676
  %v1859 = vpack.c.b16 %v1684, %v1677
  %v1860 = vpack.c.b16 %v1692, %v1685
  %v1861 = vpack.c.b16 %v1693, %v1686
  %v1862 = vpack.c.b16 %v1694, %v1687
  %v1863 = vpack.c.b16 %v1695, %v1688
  %v1864 = vpack.c.b16 %v1696, %v1689
  %v1865 = vpack.c.b16 %v1697, %v1690
  %v1866 = vpack.c.b16 %v1698, %v1691
  %v1867 = vpack.c.b16 %v1706, %v1699
  %v1868 = vpack.c.b16 %v1707, %v1700
  %v1869 = vpack.c.b16 %v1708, %v1701
  %v1870 = vpack.c.b16 %v1709, %v1702
  %v1871 = vpack.c.b16 %v1710, %v1703
  %v1872 = vpack.c.b16 %v1711, %v1704
  %v1873 = vpack.c.b16 %v1712, %v1705
  %v1874 = vpack.c.b16 %v1720, %v1713
  %v1875 = vpack.c.b16 %v1721, %v1714
  %v1876 = vpack.c.b16 %v1722, %v1715
  %v1877 = vpack.c.b16 %v1723, %v1716
  %v1878 = vpack.c.b16 %v1724, %v1717
  %v1879 = vpack.c.b16 %v1725, %v1718
  %v1880 = vpack.c.b16 %v1726, %v1719
  %v1881 = vpack.c.b16 %v1734, %v1727
  %v1882 = vpack.c.b16 %v1735, %v1728
  %v1883 = vpack.c.b16 %v1736, %v1729
  %v1884 = vpack.c.b16 %v1737, %v1730
  %v1885 = vpack.c.b16 %v1738, %v1731
  %v1886 = vpack.c.b16 %v1739, %v1732
  %v1887 = vpack.c.b16 %v1740, %v1733
  %v1888 = vpack.c.b16 %v1748, %v1741
  %v1889 = vpack.c.b16 %v1749, %v1742
  %v1890 = vpack.c.b16 %v1750, %v1743
  %v1891 = vpack.c.b16 %v1751, %v1744
  %v1892 = vpack.c.b16 %v1752, %v1745
  %v1893 = vpack.c.b16 %v1753, %v1746
  %v1894 = vpack.c.b16 %v1754, %v1747
  %v1895 = vpack.c.b16 %v1762, %v1755
  %v1896 = vpack.c.b16 %v1763, %v1756
  %v1897 = vpack.c.b16 %v1764, %v1757
  %v1898 = vpack.c.b16 %v1765, %v1758
  %v1899 = vpack.c.b16 %v1766, %v1759
  %v1900 = vpack.c.b16 %v1767, %v1760
  %v1901 = vpack.c.b16 %v1768, %v1761
  %v1902 = vpack.c.b16 %v1776, %v1769
  %v1903 = vpack.c.b16 %v1777, %v1770
  %v1904 = vpack.c.b16 %v1778, %v1771
  %v1905 = vpack.c.b16 %v1779, %v1772
  %v1906 = vpack.c.b16 %v1780, %v1773
  %v1907 = vpack.c.b16 %v1781, %v1774
  %v1908 = vpack.c.b16 %v1782, %v1775
  %v1909 = vpack.c.b16 %v1790, %v1783
  %v1910 = vpack.c.b16 %v1791, %v1784
  %v1911 = vpack.c.b16 %v1792, %v1785
  %v1912 = vpack.c.b16 %v1793, %v1786
  %v1913 = vpack.c.b16 %v1794, %v1787
  %v1914 = vpack.c.b16 %v1795, %v1788
  %v1915 = vpack.c.b16 %v1796, %v1789
  %v1916 = vpack.c.b16 %v1804, %v1797
  %v1917 = vpack.c.b16 %v1805, %v1798
  %v1918 = vpack.c.b16 %v1806, %v1799
  %v1919 = vpack.c.b16 %v1807, %v1800
  %v1920 = vpack.c.b16 %v1808, %v1801
  %v1921 = vpack.c.b16 %v1809, %v1802
  %v1922 = vpack.c.b16 %v1810, %v1803
  %2035 = vmatpush.bf16.msra.mxu0 %v1860
  %2036 = vmatpush.bf16.msra.mxu0 %v1853
  %2037 = vmatpush.bf16.msra.mxu0 %v1846
  %2038 = vmatpush.bf16.msra.mxu0 %v1839
  %2039 = vmatpush.bf16.msra.mxu0 %v1832
  %2040 = vmatpush.bf16.msra.mxu0 %v1825
  %2041 = vmatpush.bf16.msra.mxu0 %v1818
  %2042 = vmatpush.bf16.msra.mxu0 %v1811
  %2043 = vmatmul.bf16.gmra.mxu0 %v1313
  %v2044 = vpop.f32.mrf.mxu0
  %v2045 = vadd.f32 %v1445, %v2044
  %v2046 = vpop.f32.mrf.mxu0
  %2047 = vdwg.mxu0
  %2048 = vmatpush.bf16.msra.mxu0 %v1916
  %2049 = vmatpush.bf16.msra.mxu0 %v1909
  %2050 = vmatpush.bf16.msra.mxu0 %v1902
  %2051 = vmatpush.bf16.msra.mxu0 %v1895
  %2052 = vmatpush.bf16.msra.mxu0 %v1888
  %2053 = vmatpush.bf16.msra.mxu0 %v1881
  %2054 = vmatpush.bf16.msra.mxu0 %v1874
  %2055 = vmatpush.bf16.msra.mxu0 %v1867
  %2056 = vmatmul.bf16.gmra.mxu0 %v1314
  %v2057 = vpop.f32.mrf.mxu0
  %v2058 = vadd.f32 %v2045, %v2057
  %v2059 = vpop.f32.mrf.mxu0
  %2060 = vdwg.mxu0
  %2061 = vmatpush.bf16.msra.mxu0 %v1861
  %2062 = vmatpush.bf16.msra.mxu0 %v1854
  %2063 = vmatpush.bf16.msra.mxu0 %v1847
  %2064 = vmatpush.bf16.msra.mxu0 %v1840
  %2065 = vmatpush.bf16.msra.mxu0 %v1833
  %2066 = vmatpush.bf16.msra.mxu0 %v1826
  %2067 = vmatpush.bf16.msra.mxu0 %v1819
  %2068 = vmatpush.bf16.msra.mxu0 %v1812
  %2069 = vmatmul.bf16.gmra.mxu0 %v1313
  %v2070 = vpop.f32.mrf.mxu0
  %v2071 = vadd.f32 %v1446, %v2070
  %v2072 = vpop.f32.mrf.mxu0
  %2073 = vdwg.mxu0
  %2074 = vmatpush.bf16.msra.mxu0 %v1917
  %2075 = vmatpush.bf16.msra.mxu0 %v1910
  %2076 = vmatpush.bf16.msra.mxu0 %v1903
  %2077 = vmatpush.bf16.msra.mxu0 %v1896
  %2078 = vmatpush.bf16.msra.mxu0 %v1889
  %2079 = vmatpush.bf16.msra.mxu0 %v1882
  %2080 = vmatpush.bf16.msra.mxu0 %v1875
  %2081 = vmatpush.bf16.msra.mxu0 %v1868
  %2082 = vmatmul.bf16.gmra.mxu0 %v1314
  %v2083 = vpop.f32.mrf.mxu0
  %v2084 = vadd.f32 %v2071, %v2083
  %v2085 = vpop.f32.mrf.mxu0
  %2086 = vdwg.mxu0
  %2087 = vmatpush.bf16.msra.mxu0 %v1862
  %2088 = vmatpush.bf16.msra.mxu0 %v1855
  %2089 = vmatpush.bf16.msra.mxu0 %v1848
  %2090 = vmatpush.bf16.msra.mxu0 %v1841
  %2091 = vmatpush.bf16.msra.mxu0 %v1834
  %2092 = vmatpush.bf16.msra.mxu0 %v1827
  %2093 = vmatpush.bf16.msra.mxu0 %v1820
  %2094 = vmatpush.bf16.msra.mxu0 %v1813
  %2095 = vmatmul.bf16.gmra.mxu0 %v1313
  %v2096 = vpop.f32.mrf.mxu0
  %v2097 = vadd.f32 %v1447, %v2096
  %v2098 = vpop.f32.mrf.mxu0
  %2099 = vdwg.mxu0
  %2100 = vmatpush.bf16.msra.mxu0 %v1918
  %2101 = vmatpush.bf16.msra.mxu0 %v1911
  %2102 = vmatpush.bf16.msra.mxu0 %v1904
  %2103 = vmatpush.bf16.msra.mxu0 %v1897
  %2104 = vmatpush.bf16.msra.mxu0 %v1890
  %2105 = vmatpush.bf16.msra.mxu0 %v1883
  %2106 = vmatpush.bf16.msra.mxu0 %v1876
  %2107 = vmatpush.bf16.msra.mxu0 %v1869
  %2108 = vmatmul.bf16.gmra.mxu0 %v1314
  %v2109 = vpop.f32.mrf.mxu0
  %v2110 = vadd.f32 %v2097, %v2109
  %v2111 = vpop.f32.mrf.mxu0
  %2112 = vdwg.mxu0
  %2113 = vmatpush.bf16.msra.mxu0 %v1863
  %2114 = vmatpush.bf16.msra.mxu0 %v1856
  %2115 = vmatpush.bf16.msra.mxu0 %v1849
  %2116 = vmatpush.bf16.msra.mxu0 %v1842
  %2117 = vmatpush.bf16.msra.mxu0 %v1835
  %2118 = vmatpush.bf16.msra.mxu0 %v1828
  %2119 = vmatpush.bf16.msra.mxu0 %v1821
  %2120 = vmatpush.bf16.msra.mxu0 %v1814
  %2121 = vmatmul.bf16.gmra.mxu0 %v1313
  %v2122 = vpop.f32.mrf.mxu0
  %v2123 = vadd.f32 %v1448, %v2122
  %v2124 = vpop.f32.mrf.mxu0
  %2125 = vdwg.mxu0
  %2126 = vmatpush.bf16.msra.mxu0 %v1919
  %2127 = vmatpush.bf16.msra.mxu0 %v1912
  %2128 = vmatpush.bf16.msra.mxu0 %v1905
  %2129 = vmatpush.bf16.msra.mxu0 %v1898
  %2130 = vmatpush.bf16.msra.mxu0 %v1891
  %2131 = vmatpush.bf16.msra.mxu0 %v1884
  %2132 = vmatpush.bf16.msra.mxu0 %v1877
  %2133 = vmatpush.bf16.msra.mxu0 %v1870
  %2134 = vmatmul.bf16.gmra.mxu0 %v1314
  %v2135 = vpop.f32.mrf.mxu0
  %v2136 = vadd.f32 %v2123, %v2135
  %v2137 = vpop.f32.mrf.mxu0
  %2138 = vdwg.mxu0
  %2139 = vmatpush.bf16.msra.mxu0 %v1864
  %2140 = vmatpush.bf16.msra.mxu0 %v1857
  %2141 = vmatpush.bf16.msra.mxu0 %v1850
  %2142 = vmatpush.bf16.msra.mxu0 %v1843
  %2143 = vmatpush.bf16.msra.mxu0 %v1836
  %2144 = vmatpush.bf16.msra.mxu0 %v1829
  %2145 = vmatpush.bf16.msra.mxu0 %v1822
  %2146 = vmatpush.bf16.msra.mxu0 %v1815
  %2147 = vmatmul.bf16.gmra.mxu0 %v1313
  %v2148 = vpop.f32.mrf.mxu0
  %v2149 = vadd.f32 %v1449, %v2148
  %v2150 = vpop.f32.mrf.mxu0
  %2151 = vdwg.mxu0
  %2152 = vmatpush.bf16.msra.mxu0 %v1920
  %2153 = vmatpush.bf16.msra.mxu0 %v1913
  %2154 = vmatpush.bf16.msra.mxu0 %v1906
  %2155 = vmatpush.bf16.msra.mxu0 %v1899
  %2156 = vmatpush.bf16.msra.mxu0 %v1892
  %2157 = vmatpush.bf16.msra.mxu0 %v1885
  %2158 = vmatpush.bf16.msra.mxu0 %v1878
  %2159 = vmatpush.bf16.msra.mxu0 %v1871
  %2160 = vmatmul.bf16.gmra.mxu0 %v1314
  %v2161 = vpop.f32.mrf.mxu0
  %v2162 = vadd.f32 %v2149, %v2161
  %v2163 = vpop.f32.mrf.mxu0
  %2164 = vdwg.mxu0
  %2165 = vmatpush.bf16.msra.mxu0 %v1865
  %2166 = vmatpush.bf16.msra.mxu0 %v1858
  %2167 = vmatpush.bf16.msra.mxu0 %v1851
  %2168 = vmatpush.bf16.msra.mxu0 %v1844
  %2169 = vmatpush.bf16.msra.mxu0 %v1837
  %2170 = vmatpush.bf16.msra.mxu0 %v1830
  %2171 = vmatpush.bf16.msra.mxu0 %v1823
  %2172 = vmatpush.bf16.msra.mxu0 %v1816
  %2173 = vmatmul.bf16.gmra.mxu0 %v1313
  %v2174 = vpop.f32.mrf.mxu0
  %v2175 = vadd.f32 %v1450, %v2174
  %v2176 = vpop.f32.mrf.mxu0
  %2177 = vdwg.mxu0
  %2178 = vmatpush.bf16.msra.mxu0 %v1921
  %2179 = vmatpush.bf16.msra.mxu0 %v1914
  %2180 = vmatpush.bf16.msra.mxu0 %v1907
  %2181 = vmatpush.bf16.msra.mxu0 %v1900
  %2182 = vmatpush.bf16.msra.mxu0 %v1893
  %2183 = vmatpush.bf16.msra.mxu0 %v1886
  %2184 = vmatpush.bf16.msra.mxu0 %v1879
  %2185 = vmatpush.bf16.msra.mxu0 %v1872
  %2186 = vmatmul.bf16.gmra.mxu0 %v1314
  %v2187 = vpop.f32.mrf.mxu0
  %v2188 = vadd.f32 %v2175, %v2187
  %v2189 = vpop.f32.mrf.mxu0
  %2190 = vdwg.mxu0
  %2191 = vmatpush.bf16.msra.mxu0 %v1866
  %2192 = vmatpush.bf16.msra.mxu0 %v1859
  %2193 = vmatpush.bf16.msra.mxu0 %v1852
  %2194 = vmatpush.bf16.msra.mxu0 %v1845
  %2195 = vmatpush.bf16.msra.mxu0 %v1838
  %2196 = vmatpush.bf16.msra.mxu0 %v1831
  %2197 = vmatpush.bf16.msra.mxu0 %v1824
  %2198 = vmatpush.bf16.msra.mxu0 %v1817
  %2199 = vmatmul.bf16.gmra.mxu0 %v1313
  %v2200 = vpop.f32.mrf.mxu0
  %v2201 = vadd.f32 %v1451, %v2200
  %v2202 = vpop.f32.mrf.mxu0
  %2203 = vdwg.mxu0
  %2204 = vmatpush.bf16.msra.mxu0 %v1922
  %2205 = vmatpush.bf16.msra.mxu0 %v1915
  %2206 = vmatpush.bf16.msra.mxu0 %v1908
  %2207 = vmatpush.bf16.msra.mxu0 %v1901
  %2208 = vmatpush.bf16.msra.mxu0 %v1894
  %2209 = vmatpush.bf16.msra.mxu0 %v1887
  %2210 = vmatpush.bf16.msra.mxu0 %v1880
  %2211 = vmatpush.bf16.msra.mxu0 %v1873
  %2212 = vmatmul.bf16.gmra.mxu0 %v1314
  %v2213 = vpop.f32.mrf.mxu0
  %v2214 = vadd.f32 %v2201, %v2213
  %v2215 = vpop.f32.mrf.mxu0
  %2216 = vdwg.mxu0
  %v2217 = vsub.f32 0.0, %v2058
  %v2218 = vsub.f32 0.0, %v2084
  %v2219 = vsub.f32 0.0, %v2110
  %v2220 = vsub.f32 0.0, %v2136
  %v2221 = vsub.f32 0.0, %v2162
  %v2222 = vsub.f32 0.0, %v2188
  %v2223 = vsub.f32 0.0, %v2214
  %v2224 = vmul.f32 %v2217, 1.442695
  %v2225 = vpow.pop %v2224
  %v2226 = vmul.f32 %v2218, 1.442695
  %v2227 = vpow.pop %v2226
  %v2228 = vmul.f32 %v2219, 1.442695
  %v2229 = vpow.pop %v2228
  %v2230 = vmul.f32 %v2220, 1.442695
  %v2231 = vpow.pop %v2230
  %v2232 = vmul.f32 %v2221, 1.442695
  %v2233 = vpow.pop %v2232
  %v2234 = vmul.f32 %v2222, 1.442695
  %v2235 = vpow.pop %v2234
  %v2236 = vmul.f32 %v2223, 1.442695
  %v2237 = vpow.pop %v2236
  %v2238 = vadd.f32 %v2225, 1.0
  %v2239 = vadd.f32 %v2227, 1.0
  %v2240 = vadd.f32 %v2229, 1.0
  %v2241 = vadd.f32 %v2231, 1.0
  %v2242 = vadd.f32 %v2233, 1.0
  %v2243 = vadd.f32 %v2235, 1.0
  %v2244 = vadd.f32 %v2237, 1.0
  %v2245 = vrcp.pop %v2238
  %v2246 = vrcp.pop %v2239
  %v2247 = vrcp.pop %v2240
  %v2248 = vrcp.pop %v2241
  %v2249 = vrcp.pop %v2242
  %v2250 = vrcp.pop %v2243
  %v2251 = vrcp.pop %v2244
  %2252 = vst [vmem:[%s13] sm:$0xff] %v2245
  %2253 = vst [vmem:[%s13 + $0x8] sm:$0xff] %v2246
  %2254 = vst [vmem:[%s13 + $0x10] sm:$0xff] %v2247
  %2255 = vst [vmem:[%s13 + $0x18] sm:$0xff] %v2248
  %2256 = vst [vmem:[%s13 + $0x20] sm:$0xff] %v2249
  %2257 = vst [vmem:[%s13 + $0x28] sm:$0xff] %v2250
  %2258 = vst.msk [vmem:[%s13 + $0x30] sm:$0xff] %vm667, %v2251
  // Predicated region
  $region54: #{ae_forward.1} parent=0 // pred_check
    _
  $region55: #{ae_forward.1} parent=0 // pred_check_branch
    %2260 = sbr.rel (0) target = $region57
  $region56: #{ae_forward.1} parent=0 // pred_region
    _
  $region57: #{ae_forward.1} parent=0 // pred_fallthru
    _
  // Predicated region
  $region58: #{ae_forward.1} parent=0 // pred_check
    _
  $region59: #{ae_forward.1} parent=0 // pred_check_branch
    %2262 = sbr.rel (0) target = $region61
  $region60: #{ae_forward.1} parent=0 // pred_region
    _
  $region61: #{ae_forward.1} parent=0 // pred_fallthru
    _

</llo_original>
